<compile_context>
chip_gen: v7x
topology: tpu7x:2x2x1
jax: 0.10.0
libtpu: 0.0.40
codegen_flags: <defaults>
</compile_context>

<pallas_src>
import jax
import jax.numpy as jnp
from jax.experimental import pallas as pl
from jax.experimental.pallas import tpu as pltpu

NODE = 10
TIMELIMIT = 16
FLAT = (NODE - 2) * (NODE - 2)   # 64
FLAT_PAD = 128                   # conv-flat lanes padded 64 -> 128
H1, H1_PAD = 1000, 1024          # fc1 lanes padded 1000 -> 1024
H2, H2_PAD = 100, 128            # fc2 / fc(y) lanes padded 100 -> 128


# ----------------------------------------------------------------------------
# Fused kernel: conv(+relu) -> fc1(+relu) -> fc2(+relu) -> fc(y) -> cat -> out
# ----------------------------------------------------------------------------
def fused_net_kernel(x_ref, y_ref,
                     wc_ref, bc_ref,
                     w1_ref, b1_ref,
                     w2_ref, b2_ref,
                     wy_ref, by_ref,
                     wot_ref, wob_ref, bo_ref,
                     o_ref):
    f32 = jnp.float32

    # relu(conv1(x)) expressed as an im2col matmul. Padded lanes [64:128) of
    # `flat` are exactly 0 (zero weight cols + zero bias lanes).
    flat = jnp.maximum(
        jnp.dot(x_ref[...], wc_ref[...], preferred_element_type=f32)
        + bc_ref[...], 0.0)                                    # (B, 128)

    # relu(fc1(.))   -> (B, 1024), padded lanes exactly 0
    a1 = jnp.maximum(
        jnp.dot(flat, w1_ref[...], preferred_element_type=f32) + b1_ref[...],
        0.0)

    # relu(fc2(.))   -> (B, 128), padded lanes exactly 0
    a2 = jnp.maximum(
        jnp.dot(a1, w2_ref[...], preferred_element_type=f32) + b2_ref[...],
        0.0)

    # fc(y)  (no relu)  -> (RY, 128), padded lanes exactly 0
    yf = (jnp.dot(y_ref[...], wy_ref[...], preferred_element_type=f32)
          + by_ref[...])

    # torch.cat((a2, yf), dim=0).view(-1, 200) @ out_W.T + out_b
    #   row j of the viewed tensor = [cat[2j] | cat[2j+1]]
    #   => out = even_rows @ Wo_top + odd_rows @ Wo_bot + out_b
    cat = jnp.concatenate([a2, yf], axis=0)                    # (B+RY, 128)
    rows = cat.shape[0]
    even = jnp.concatenate([cat[i:i + 1] for i in range(0, rows, 2)], axis=0)
    odd = jnp.concatenate([cat[i:i + 1] for i in range(1, rows, 2)], axis=0)
    out = (jnp.dot(even, wot_ref[...], preferred_element_type=f32)
           + jnp.dot(odd, wob_ref[...], preferred_element_type=f32)
           + bo_ref[...])
    o_ref[...] = out.astype(o_ref.dtype)


# ----------------------------------------------------------------------------
# Parameters: raw (PyTorch layout) init + one-time packing for the kernel
# ----------------------------------------------------------------------------
def init_params(key):
    ks = jax.random.split(key, 10)
    n = lambda k, shape: 0.1 * jax.random.normal(k, shape, jnp.float32)
    return {
        "conv_w": n(ks[0], (3, 3)),            # Conv2d(1,1,3) weight, squeezed
        "conv_b": n(ks[1], (1,)),
        "fc1_w": n(ks[2], (H1, FLAT)),         # Linear(64, 1000), (out, in)
        "fc1_b": n(ks[3], (H1,)),
        "fc2_w": n(ks[4], (H2, H1)),           # Linear(1000, 100)
        "fc2_b": n(ks[5], (H2,)),
        "fc_w": n(ks[6], (H2, 2)),             # Linear(2, 100)
        "fc_b": n(ks[7], (H2,)),
        "out_w": n(ks[8], (TIMELIMIT, 200)),   # Linear(200, timelimit)
        "out_b": n(ks[9], (TIMELIMIT,)),
    }


def pack_params(p):
    """One-time transpose / zero-pad / im2col of the weights (hoisted)."""
    f32 = jnp.float32
    cw = p["conv_w"].astype(f32)

    # im2col matrix: Wc[r*NODE + c, oi*8 + oj] = cw[r-oi, c-oj] if valid else 0
    r = jnp.arange(NODE)[:, None, None, None]
    c = jnp.arange(NODE)[None, :, None, None]
    oi = jnp.arange(NODE - 2)[None, None, :, None]
    oj = jnp.arange(NODE - 2)[None, None, None, :]
    di, dj = r - oi, c - oj
    valid = (di >= 0) & (di < 3) & (dj >= 0) & (dj < 3)
    vals = cw[jnp.clip(di, 0, 2), jnp.clip(dj, 0, 2)]
    wc_core = jnp.where(valid, vals, 0.0).reshape(NODE * NODE, FLAT)
    wc = jnp.pad(wc_core, ((0, 0), (0, FLAT_PAD - FLAT)))            # (100,128)
    bc = jnp.pad(jnp.full((1, FLAT), p["conv_b"][0], f32),
                 ((0, 0), (0, FLAT_PAD - FLAT)))                     # (1,128)

    w1 = jnp.pad(p["fc1_w"].T, ((0, FLAT_PAD - FLAT), (0, H1_PAD - H1)))
    b1 = jnp.pad(p["fc1_b"][None, :], ((0, 0), (0, H1_PAD - H1)))
    w2 = jnp.pad(p["fc2_w"].T, ((0, H1_PAD - H1), (0, H2_PAD - H2)))
    b2 = jnp.pad(p["fc2_b"][None, :], ((0, 0), (0, H2_PAD - H2)))
    wy = jnp.pad(p["fc_w"].T, ((0, 0), (0, H2_PAD - H2)))            # (2,128)
    by = jnp.pad(p["fc_b"][None, :], ((0, 0), (0, H2_PAD - H2)))
    wo_t = p["out_w"].T                                              # (200,16)
    wot = jnp.pad(wo_t[:H2], ((0, H2_PAD - H2), (0, 0)))             # (128,16)
    wob = jnp.pad(wo_t[H2:], ((0, H2_PAD - H2), (0, 0)))             # (128,16)
    bo = p["out_b"][None, :]                                         # (1,16)

    return {"wc": wc, "bc": bc, "w1": w1, "b1": b1, "w2": w2, "b2": b2,
            "wy": wy, "by": by, "wot": wot, "wob": wob, "bo": bo}


# ----------------------------------------------------------------------------
# Forward pass (single fused pallas_call)
# ----------------------------------------------------------------------------
def net_forward(packed, x, y):
    B = x.shape[0]
    xf = x.reshape(B, NODE * NODE).astype(jnp.float32)   # free bitcast reshape
    yv = y.reshape(-1, 2).astype(jnp.float32)            # y.view(-1, 2)
    ry = yv.shape[0]
    total = B + ry
    assert total % 2 == 0, "cat(dim=0).view(-1,200) needs an even row count"
    rows_out = total // 2

    vmem = pl.BlockSpec(memory_space=pltpu.MemorySpace.VMEM)
    return pl.pallas_call(
        fused_net_kernel,
        out_shape=jax.ShapeDtypeStruct((rows_out, TIMELIMIT), jnp.float32),
        in_specs=[vmem] * 13,
        out_specs=vmem,
    )(xf, yv,
      packed["wc"], packed["bc"],
      packed["w1"], packed["b1"],
      packed["w2"], packed["b2"],
      packed["wy"], packed["by"],
      packed["wot"], packed["wob"], packed["bo"])


def net_forward_ref(params, x, y):
    """Plain-JAX reference (PyTorch-equivalent) for correctness checking."""
    hi = jax.lax.Precision.HIGHEST
    B = x.shape[0]
    x3 = x.reshape(B, NODE, NODE)
    acc = jnp.zeros((B, NODE - 2, NODE - 2), jnp.float32)
    for di in range(3):
        for dj in range(3):
            acc = acc + params["conv_w"][di, dj] * x3[:, di:di + 8, dj:dj + 8]
    h = jnp.maximum(acc + params["conv_b"][0], 0.0)
    flat = h.reshape(B, FLAT)
    a1 = jnp.maximum(jnp.dot(flat, params["fc1_w"].T, precision=hi)
                     + params["fc1_b"], 0.0)
    a2 = jnp.maximum(jnp.dot(a1, params["fc2_w"].T, precision=hi)
                     + params["fc2_b"], 0.0)
    yf = jnp.dot(y.reshape(-1, 2), params["fc_w"].T, precision=hi) + params["fc_b"]
    cat = jnp.concatenate([a2, yf], axis=0).reshape(-1, 200)
    return jnp.dot(cat, params["out_w"].T, precision=hi) + params["out_b"]


if __name__ == "__main__":
    key = jax.random.PRNGKey(0)
    kp, kx, ky = jax.random.split(key, 3)
    params = init_params(kp)
    packed = jax.tree_util.tree_map(jax.block_until_ready, pack_params(params))

    B = 2                                               # state batch
    x = jax.random.normal(kx, (B, 1, NODE, NODE), jnp.float32)
    y = jax.random.normal(ky, (2, 2), jnp.float32)      # y.view(-1, 2) = (2, 2)

    fwd = jax.jit(net_forward)
    out = jax.block_until_ready(fwd(packed, x, y))      # ((B+2)//2, 16) = (2, 16)

    ref = net_forward_ref(params, x, y)
    assert out.shape == ((B + y.size // 2) // 2, TIMELIMIT), out.shape
    assert jnp.allclose(out, ref, rtol=1e-3, atol=1e-3), "mismatch vs reference"

    print("KERNEL_OK")
</pallas_src>

<mosaic_0001>
module attributes {stable_mosaic.version = 11 : i64} {
  func.func @fused_net_kernel(%arg0: memref<2x100xf32, #tpu.memory_space<vmem>>, %arg1: memref<2x2xf32, #tpu.memory_space<vmem>>, %arg2: memref<100x128xf32, #tpu.memory_space<vmem>>, %arg3: memref<1x128xf32, #tpu.memory_space<vmem>>, %arg4: memref<128x1024xf32, #tpu.memory_space<vmem>>, %arg5: memref<1x1024xf32, #tpu.memory_space<vmem>>, %arg6: memref<1024x128xf32, #tpu.memory_space<vmem>>, %arg7: memref<1x128xf32, #tpu.memory_space<vmem>>, %arg8: memref<2x128xf32, #tpu.memory_space<vmem>>, %arg9: memref<1x128xf32, #tpu.memory_space<vmem>>, %arg10: memref<128x16xf32, #tpu.memory_space<vmem>>, %arg11: memref<128x16xf32, #tpu.memory_space<vmem>>, %arg12: memref<1x16xf32, #tpu.memory_space<vmem>>, %arg13: memref<2x16xf32, #tpu.memory_space<vmem>>) attributes {dimension_semantics = [], scalar_prefetch = 0 : i64, scratch_operands = 0 : i64, tpu.core_type = #tpu.core_type<tc>} {
    %c0 = arith.constant 0 : index
    %c0_0 = arith.constant 0 : index
    %0 = vector.load %arg0[%c0, %c0_0] : memref<2x100xf32, #tpu.memory_space<vmem>>, vector<2x100xf32>
    %c0_1 = arith.constant 0 : index
    %c0_2 = arith.constant 0 : index
    %1 = vector.load %arg2[%c0_1, %c0_2] : memref<100x128xf32, #tpu.memory_space<vmem>>, vector<100x128xf32>
    %cst = arith.constant dense<0.000000e+00> : vector<2x128xf32>
    %2 = tpu.matmul %0, %1, %cst {dimension_numbers = #tpu.dot_dimension_numbers<[1], [0], [0], [1], [0, 0, 1, 1], [], []>} : vector<2x100xf32>, vector<100x128xf32>, vector<2x128xf32> -> vector<2x128xf32>
    %c0_3 = arith.constant 0 : index
    %c0_4 = arith.constant 0 : index
    %3 = vector.load %arg3[%c0_3, %c0_4] : memref<1x128xf32, #tpu.memory_space<vmem>>, vector<1x128xf32>
    %4 = vector.broadcast %3 : vector<1x128xf32> to vector<2x128xf32>
    %5 = arith.addf %2, %4 : vector<2x128xf32>
    %cst_5 = arith.constant 0.000000e+00 : f32
    %6 = vector.broadcast %cst_5 : f32 to vector<2x128xf32>
    %7 = arith.maximumf %5, %6 : vector<2x128xf32>
    %c0_6 = arith.constant 0 : index
    %c0_7 = arith.constant 0 : index
    %8 = vector.load %arg4[%c0_6, %c0_7] : memref<128x1024xf32, #tpu.memory_space<vmem>>, vector<128x1024xf32>
    %cst_8 = arith.constant dense<0.000000e+00> : vector<2x1024xf32>
    %9 = tpu.matmul %7, %8, %cst_8 {dimension_numbers = #tpu.dot_dimension_numbers<[1], [0], [0], [1], [0, 0, 1, 1], [], []>} : vector<2x128xf32>, vector<128x1024xf32>, vector<2x1024xf32> -> vector<2x1024xf32>
    %c0_9 = arith.constant 0 : index
    %c0_10 = arith.constant 0 : index
    %10 = vector.load %arg5[%c0_9, %c0_10] : memref<1x1024xf32, #tpu.memory_space<vmem>>, vector<1x1024xf32>
    %11 = vector.broadcast %10 : vector<1x1024xf32> to vector<2x1024xf32>
    %12 = arith.addf %9, %11 : vector<2x1024xf32>
    %cst_11 = arith.constant 0.000000e+00 : f32
    %13 = vector.broadcast %cst_11 : f32 to vector<2x1024xf32>
    %14 = arith.maximumf %12, %13 : vector<2x1024xf32>
    %c0_12 = arith.constant 0 : index
    %c0_13 = arith.constant 0 : index
    %15 = vector.load %arg6[%c0_12, %c0_13] : memref<1024x128xf32, #tpu.memory_space<vmem>>, vector<1024x128xf32>
    %cst_14 = arith.constant dense<0.000000e+00> : vector<2x128xf32>
    %16 = tpu.matmul %14, %15, %cst_14 {dimension_numbers = #tpu.dot_dimension_numbers<[1], [0], [0], [1], [0, 0, 1, 1], [], []>} : vector<2x1024xf32>, vector<1024x128xf32>, vector<2x128xf32> -> vector<2x128xf32>
    %c0_15 = arith.constant 0 : index
    %c0_16 = arith.constant 0 : index
    %17 = vector.load %arg7[%c0_15, %c0_16] : memref<1x128xf32, #tpu.memory_space<vmem>>, vector<1x128xf32>
    %18 = vector.broadcast %17 : vector<1x128xf32> to vector<2x128xf32>
    %19 = arith.addf %16, %18 : vector<2x128xf32>
    %cst_17 = arith.constant 0.000000e+00 : f32
    %20 = vector.broadcast %cst_17 : f32 to vector<2x128xf32>
    %21 = arith.maximumf %19, %20 : vector<2x128xf32>
    %c0_18 = arith.constant 0 : index
    %c0_19 = arith.constant 0 : index
    %22 = vector.load %arg1[%c0_18, %c0_19] : memref<2x2xf32, #tpu.memory_space<vmem>>, vector<2x2xf32>
    %c0_20 = arith.constant 0 : index
    %c0_21 = arith.constant 0 : index
    %23 = vector.load %arg8[%c0_20, %c0_21] : memref<2x128xf32, #tpu.memory_space<vmem>>, vector<2x128xf32>
    %cst_22 = arith.constant dense<0.000000e+00> : vector<2x128xf32>
    %24 = tpu.matmul %22, %23, %cst_22 {dimension_numbers = #tpu.dot_dimension_numbers<[1], [0], [0], [1], [0, 0, 1, 1], [], []>} : vector<2x2xf32>, vector<2x128xf32>, vector<2x128xf32> -> vector<2x128xf32>
    %c0_23 = arith.constant 0 : index
    %c0_24 = arith.constant 0 : index
    %25 = vector.load %arg9[%c0_23, %c0_24] : memref<1x128xf32, #tpu.memory_space<vmem>>, vector<1x128xf32>
    %26 = vector.broadcast %25 : vector<1x128xf32> to vector<2x128xf32>
    %27 = arith.addf %24, %26 : vector<2x128xf32>
    %28 = tpu.concatenate %21, %27 in 0 : vector<2x128xf32>, vector<2x128xf32> -> vector<4x128xf32>
    %29 = vector.extract_strided_slice %28 {offsets = [0, 0], sizes = [1, 128], strides = [1, 1]} : vector<4x128xf32> to vector<1x128xf32>
    %30 = vector.extract_strided_slice %28 {offsets = [2, 0], sizes = [1, 128], strides = [1, 1]} : vector<4x128xf32> to vector<1x128xf32>
    %31 = tpu.concatenate %29, %30 in 0 : vector<1x128xf32>, vector<1x128xf32> -> vector<2x128xf32>
    %32 = vector.extract_strided_slice %28 {offsets = [1, 0], sizes = [1, 128], strides = [1, 1]} : vector<4x128xf32> to vector<1x128xf32>
    %33 = vector.extract_strided_slice %28 {offsets = [3, 0], sizes = [1, 128], strides = [1, 1]} : vector<4x128xf32> to vector<1x128xf32>
    %34 = tpu.concatenate %32, %33 in 0 : vector<1x128xf32>, vector<1x128xf32> -> vector<2x128xf32>
    %c0_25 = arith.constant 0 : index
    %c0_26 = arith.constant 0 : index
    %35 = vector.load %arg10[%c0_25, %c0_26] : memref<128x16xf32, #tpu.memory_space<vmem>>, vector<128x16xf32>
    %cst_27 = arith.constant dense<0.000000e+00> : vector<2x16xf32>
    %36 = tpu.matmul %31, %35, %cst_27 {dimension_numbers = #tpu.dot_dimension_numbers<[1], [0], [0], [1], [0, 0, 1, 1], [], []>} : vector<2x128xf32>, vector<128x16xf32>, vector<2x16xf32> -> vector<2x16xf32>
    %c0_28 = arith.constant 0 : index
    %c0_29 = arith.constant 0 : index
    %37 = vector.load %arg11[%c0_28, %c0_29] : memref<128x16xf32, #tpu.memory_space<vmem>>, vector<128x16xf32>
    %cst_30 = arith.constant dense<0.000000e+00> : vector<2x16xf32>
    %38 = tpu.matmul %34, %37, %cst_30 {dimension_numbers = #tpu.dot_dimension_numbers<[1], [0], [0], [1], [0, 0, 1, 1], [], []>} : vector<2x128xf32>, vector<128x16xf32>, vector<2x16xf32> -> vector<2x16xf32>
    %39 = arith.addf %36, %38 : vector<2x16xf32>
    %c0_31 = arith.constant 0 : index
    %c0_32 = arith.constant 0 : index
    %40 = vector.load %arg12[%c0_31, %c0_32] : memref<1x16xf32, #tpu.memory_space<vmem>>, vector<1x16xf32>
    %41 = vector.broadcast %40 : vector<1x16xf32> to vector<2x16xf32>
    %42 = arith.addf %39, %41 : vector<2x16xf32>
    %c0_33 = arith.constant 0 : index
    %c0_34 = arith.constant 0 : index
    %43 = vector.load %arg13[%c0_33, %c0_34] : memref<2x16xf32, #tpu.memory_space<vmem>>, vector<2x16xf32>
    tpu.vector_store %arg13[%c0_33, %c0_34], %42 {strides = array<i32>} : memref<2x16xf32, #tpu.memory_space<vmem>>, vector<2x16xf32>,
    return
  }
}

</mosaic_0001>

<llo_original>
// kernel: net_forward.1
$region0: #{net_forward.1}
  #allocation0 [shape = 'u32[]', space=smem, size = 0x4, offset = 0x4, fixed_abs, tag = 'smem constant byte address 0x4 - core index']
  #allocation1 [shape = 'u32[144,128]{1,0:T(1,128)}', space=vmem, size = 0x12000, scoped, tag = 'internal scratch']
  %s0 = inlined_call_operand.vmem [shape: f32[2,100], index: 0, kind: input, shape index: {}]
  %s1 = inlined_call_operand.vmem [shape: f32[2,2], index: 1, kind: input, shape index: {}]
  %s2 = inlined_call_operand.vmem [shape: f32[100,128], index: 2, kind: input, shape index: {}]
  %s3 = inlined_call_operand.vmem [shape: f32[1,128], index: 3, kind: input, shape index: {}]
  %s4 = inlined_call_operand.hbm [shape: f32[128,1024], index: 4, kind: input, shape index: {}]
  %s5 = inlined_call_operand.vmem [shape: f32[1,1024], index: 5, kind: input, shape index: {}]
  %s6 = inlined_call_operand.hbm [shape: f32[1024,128], index: 6, kind: input, shape index: {}]
  %s7 = inlined_call_operand.vmem [shape: f32[1,128], index: 7, kind: input, shape index: {}]
  %s8 = inlined_call_operand.vmem [shape: f32[2,128], index: 8, kind: input, shape index: {}]
  %s9 = inlined_call_operand.vmem [shape: f32[1,128], index: 9, kind: input, shape index: {}]
  %s10 = inlined_call_operand.vmem [shape: f32[128,16], index: 10, kind: input, shape index: {}]
  %s11 = inlined_call_operand.vmem [shape: f32[128,16], index: 11, kind: input, shape index: {}]
  %s12 = inlined_call_operand.vmem [shape: f32[1,16], index: 12, kind: input, shape index: {}]
  %s13 = inlined_call_operand.hbm [shape: f32[2,16], index: 13, kind: output, shape index: {}]
  %s14 = sld [smem:[#allocation0]]
  $region70: #{net_forward.1} parent=0
    _
  %s16 = ssub.s32 1, %s14
  %s17 = scalar_select 0, %s16, %s14
  $region1: #{net_forward.1} parent=0
    #allocation2 [shape = 'u8[524288]{0}', space=vmem, size = 0x80000, scoped, tag = 'input window, operand 4, single buffered']
    #allocation3 [shape = 's32[1]{0}', space=sflag, size = 0x4, scoped, tag = 'scoped memory for net_forward.1']
    #allocation4 [shape = 's32[1]{0}', space=sflag, size = 0x4, scoped, tag = 'scoped memory for net_forward.1']
    #allocation5 [shape = 'u8[524288]{0}', space=vmem, size = 0x80000, scoped, tag = 'input window, operand 6, single buffered']
    #allocation6 [shape = 's32[1]{0}', space=sflag, size = 0x4, scoped, tag = 'scoped memory for net_forward.1']
    #allocation7 [shape = 'u8[1024]{0}', space=vmem, size = 0x400, scoped, tag = 'output window, operand 0, single buffered']
    %18 = vsyncpa [#allocation3], 0
    %19 = vsyncpa [#allocation6], 0
    %20 = vsyncpa [#allocation4], 0
    // Predicated region
    $region2: #{net_forward.1} parent=1 // pred_check
      _
    $region3: #{net_forward.1} parent=1 // pred_check_branch
      %22 = sbr.rel (0) target = $region5
    $region4: #{net_forward.1} parent=1 // pred_region
      _
    $region5: #{net_forward.1} parent=1 // pred_fallthru
      _
    // Predicated region
    $region6: #{net_forward.1} parent=1 // pred_check
      _
    $region7: #{net_forward.1} parent=1 // pred_check_branch
      %24 = sbr.rel (0) target = $region9
    $region8: #{net_forward.1} parent=1 // pred_region
      _
    $region9: #{net_forward.1} parent=1 // pred_fallthru
      _
    // Predicated region
    $region10: #{net_forward.1} parent=1 // pred_check
      _
    $region11: #{net_forward.1} parent=1 // pred_check_branch
      %26 = sbr.rel (0) target = $region13
    $region12: #{net_forward.1} parent=1 // pred_region
      _
    $region13: #{net_forward.1} parent=1 // pred_fallthru
      _
    // Predicated region
    $region14: #{net_forward.1} parent=1 // pred_check
      _
    $region15: #{net_forward.1} parent=1 // pred_check_branch
      %28 = sbr.rel (0) target = $region17
    $region16: #{net_forward.1} parent=1 // pred_region
      _
    $region17: #{net_forward.1} parent=1 // pred_fallthru
      _
    // Predicated region
    $region18: #{net_forward.1} parent=1 // pred_check
      _
    $region19: #{net_forward.1} parent=1 // pred_check_branch
      %30 = sbr.rel (0) target = $region21
    $region20: #{net_forward.1} parent=1 // pred_region
      %s32 = ssub.s32 16384, 16384
      %33 = vsyncadd [#allocation3], %s32
      %s34 = sshll.u32 [#allocation2], 4
      %s35 = int_to_ptr.vmem [resolvable:$true] %s34
      %40 = dma.hbm_to_vmem [thread:$0]  %s4, 16384, %s35, [#allocation3], 1024, 1024, 64
    $region21: #{net_forward.1} parent=1 // pred_fallthru
      _
    // Predicated region
    $region22: #{net_forward.1} parent=1 // pred_check
      _
    $region23: #{net_forward.1} parent=1 // pred_check_branch
      %42 = sbr.rel (0) target = $region25
    $region24: #{net_forward.1} parent=1 // pred_region
      _
    $region25: #{net_forward.1} parent=1 // pred_fallthru
      _
    // Predicated region
    $region26: #{net_forward.1} parent=1 // pred_check
      _
    $region27: #{net_forward.1} parent=1 // pred_check_branch
      %44 = sbr.rel (0) target = $region29
    $region28: #{net_forward.1} parent=1 // pred_region
      %s46 = ssub.s32 16384, 16384
      %47 = vsyncadd [#allocation6], %s46
      %s48 = sshll.u32 [#allocation5], 4
      %s49 = int_to_ptr.vmem [resolvable:$true] %s48
      %54 = dma.hbm_to_vmem [thread:$0]  %s6, 16384, %s49, [#allocation6], 128, 128, 8
    $region29: #{net_forward.1} parent=1 // pred_fallthru
      _
    // Predicated region
    $region30: #{net_forward.1} parent=1 // pred_check
      _
    $region31: #{net_forward.1} parent=1 // pred_check_branch
      %56 = sbr.rel (0) target = $region33
    $region32: #{net_forward.1} parent=1 // pred_region
      _
    $region33: #{net_forward.1} parent=1 // pred_fallthru
      _
    // Predicated region
    $region34: #{net_forward.1} parent=1 // pred_check
      _
    $region35: #{net_forward.1} parent=1 // pred_check_branch
      %58 = sbr.rel (0) target = $region37
    $region36: #{net_forward.1} parent=1 // pred_region
      _
    $region37: #{net_forward.1} parent=1 // pred_fallthru
      _
    // Predicated region
    $region38: #{net_forward.1} parent=1 // pred_check
      _
    $region39: #{net_forward.1} parent=1 // pred_check_branch
      %60 = sbr.rel (0) target = $region41
    $region40: #{net_forward.1} parent=1 // pred_region
      _
    $region41: #{net_forward.1} parent=1 // pred_fallthru
      _
    // Predicated region
    $region42: #{net_forward.1} parent=1 // pred_check
      _
    $region43: #{net_forward.1} parent=1 // pred_check_branch
      %62 = sbr.rel (0) target = $region45
    $region44: #{net_forward.1} parent=1 // pred_region
      _
    $region45: #{net_forward.1} parent=1 // pred_fallthru
      _
    // Predicated region
    $region46: #{net_forward.1} parent=1 // pred_check
      _
    $region47: #{net_forward.1} parent=1 // pred_check_branch
      %64 = sbr.rel (0) target = $region49
    $region48: #{net_forward.1} parent=1 // pred_region
      _
    $region49: #{net_forward.1} parent=1 // pred_fallthru
      _
    // Predicated region
    $region50: #{net_forward.1} parent=1 // pred_check
      _
    $region51: #{net_forward.1} parent=1 // pred_check_branch
      %66 = sbr.rel (0) target = $region53
    $region52: #{net_forward.1} parent=1 // pred_region
      _
    $region53: #{net_forward.1} parent=1 // pred_fallthru
      _
    // Predicated region
    $region54: #{net_forward.1} parent=1 // pred_check
      _
    $region55: #{net_forward.1} parent=1 // pred_check_branch
      %68 = sbr.rel (0) target = $region57
    $region56: #{net_forward.1} parent=1 // pred_region
      %69 = dma.done [#allocation3], 16384
    $region57: #{net_forward.1} parent=1 // pred_fallthru
      _
    // Predicated region
    $region58: #{net_forward.1} parent=1 // pred_check
      _
    $region59: #{net_forward.1} parent=1 // pred_check_branch
      %71 = sbr.rel (0) target = $region61
    $region60: #{net_forward.1} parent=1 // pred_region
      %72 = dma.done [#allocation6], 16384
    $region61: #{net_forward.1} parent=1 // pred_fallthru
      _
    %v73 = vld [vmem:[%s0] sm:$0x3]
    %v74 = vld [vmem:[%s2] sm:$0xff]
    %v75 = vld [vmem:[%s2 + $0x8] sm:$0xff]
    %v76 = vld [vmem:[%s2 + $0x10] sm:$0xff]
    %v77 = vld [vmem:[%s2 + $0x18] sm:$0xff]
    %v78 = vld [vmem:[%s2 + $0x20] sm:$0xff]
    %v79 = vld [vmem:[%s2 + $0x28] sm:$0xff]
    %v80 = vld [vmem:[%s2 + $0x30] sm:$0xff]
    %v81 = vld [vmem:[%s2 + $0x38] sm:$0xff]
    %v82 = vld [vmem:[%s2 + $0x40] sm:$0xff]
    %v83 = vld [vmem:[%s2 + $0x48] sm:$0xff]
    %v84 = vld [vmem:[%s2 + $0x50] sm:$0xff]
    %v85 = vld [vmem:[%s2 + $0x58] sm:$0xff]
    %v86 = vld [vmem:[%s2 + $0x60] sm:$0xf]
    %v87 = vld [vmem:[%s3] sm:$0x1]
    %v89 = vlaneseq
    %v90 = vshrl.u32 %v89, 7
    %v91 = vsub.s32 0, %v90
    %v92 = vrot.slane %v87, %v91
    %vm94 = vcmask 818176
    %v96 = vsel %vm94, %v73, 0
    %vm98 = vcmask 1043456
    %v100 = vsel %vm98, %v86, 0
    %102 = vmatprep.subr.mxu0 0.0
    %103 = vmatpush1.msra.mxu0 %v74
    %104 = vmatprep.subr.mxu0 0.0
    %105 = vmatpush1.msra.mxu0 %v75
    %106 = vmatprep.subr.mxu0 0.0
    %107 = vmatpush1.msra.mxu0 %v76
    %108 = vmatprep.subr.mxu0 0.0
    %109 = vmatpush1.msra.mxu0 %v77
    %110 = vmatprep.subr.mxu0 0.0
    %111 = vmatpush1.msra.mxu0 %v78
    %112 = vmatprep.subr.mxu0 0.0
    %113 = vmatpush1.msra.mxu0 %v79
    %114 = vmatprep.subr.mxu0 0.0
    %115 = vmatpush1.msra.mxu0 %v80
    %116 = vmatprep.subr.mxu0 0.0
    %117 = vmatpush1.msra.mxu0 %v81
    %118 = vmatprep.subr.mxu0 0.0
    %119 = vmatpush1.msra.mxu0 %v82
    %120 = vmatprep.subr.mxu0 0.0
    %121 = vmatpush1.msra.mxu0 %v83
    %122 = vmatprep.subr.mxu0 0.0
    %123 = vmatpush1.msra.mxu0 %v84
    %124 = vmatprep.subr.mxu0 0.0
    %125 = vmatpush1.msra.mxu0 %v85
    %126 = vmatprep.subr.mxu0 0.0
    %127 = vmatpush1.msra.mxu0 %v100
    %128 = vmatprep.subr.mxu0 0.0
    %129 = vmatpush1.msra.mxu0 0.0
    %130 = vmatprep.subr.mxu0 0.0
    %131 = vmatpush1.msra.mxu0 0.0
    %132 = vmatprep.subr.mxu0 0.0
    %133 = vmatpush1.msra.mxu0 0.0
    %134 = vmatprep.subr.mxu0 0.0
    %135 = vmatpush1.msra.mxu0 0.0
    %136 = vmatprep.subr.mxu0 0.0
    %137 = vmatpush1.msra.mxu0 0.0
    %138 = vmatprep.subr.mxu0 0.0
    %139 = vmatpush1.msra.mxu0 0.0
    %140 = vmatprep.subr.mxu0 0.0
    %141 = vmatpush1.msra.mxu0 0.0
    %142 = vmatprep.subr.mxu0 0.0
    %143 = vmatpush1.msra.mxu0 0.0
    %144 = vmatprep.subr.mxu0 0.0
    %145 = vmatpush1.msra.mxu0 0.0
    %146 = vmatprep.subr.mxu0 0.0
    %147 = vmatpush1.msra.mxu0 0.0
    %148 = vmatprep.subr.mxu0 0.0
    %149 = vmatpush1.msra.mxu0 0.0
    %150 = vmatprep.subr.mxu0 0.0
    %151 = vmatpush1.msra.mxu0 0.0
    %152 = vmatprep.subr.mxu0 0.0
    %153 = vmatpush1.msra.mxu0 0.0
    %154 = vmatprep.subr.mxu0 0.0
    %155 = vmatpush1.msra.mxu0 0.0
    %156 = vmatprep.subr.mxu0 0.0
    %157 = vmatpush1.msra.mxu0 0.0
    %158 = vmatprep.subr.mxu0 0.0
    %159 = vmatpush1.msra.mxu0 0.0
    %160 = vmatprep.subr.mxu0 0.0
    %161 = vmatpush1.msra.mxu0 0.0
    %162 = vmatprep.subr.mxu0 0.0
    %163 = vmatpush1.msra.mxu0 0.0
    %164 = vmatprep.subr.mxu0 0.0
    %165 = vmatpush1.msra.mxu0 0.0
    %166 = vmatprep.mubr.f32.mxu0 0.0
    %167 = vmatmul.mubr.f32.gmra.mrb[0].mxu0 %v96
    %v168 = vpop.f32.mrb[0].mxu0
    %v169 = vadd.f32 %v92, %v168
    %v170 = vpop.f32.mrb[0].mxu0
    %171 = vdwg.mxu0
    %v172 = vmax.f32 %v169, 0.0
    %v173 = vld [vmem:[#allocation2] sm:$0xff]
    %v174 = vld [vmem:[#allocation2 + $0x8] sm:$0xff]
    %v175 = vld [vmem:[#allocation2 + $0x10] sm:$0xff]
    %v176 = vld [vmem:[#allocation2 + $0x18] sm:$0xff]
    %v177 = vld [vmem:[#allocation2 + $0x20] sm:$0xff]
    %v178 = vld [vmem:[#allocation2 + $0x28] sm:$0xff]
    %v179 = vld [vmem:[#allocation2 + $0x30] sm:$0xff]
    %v180 = vld [vmem:[#allocation2 + $0x38] sm:$0xff]
    %v181 = vld [vmem:[#allocation2 + $0x40] sm:$0xff]
    %v182 = vld [vmem:[#allocation2 + $0x48] sm:$0xff]
    %v183 = vld [vmem:[#allocation2 + $0x50] sm:$0xff]
    %v184 = vld [vmem:[#allocation2 + $0x58] sm:$0xff]
    %v185 = vld [vmem:[#allocation2 + $0x60] sm:$0xff]
    %v186 = vld [vmem:[#allocation2 + $0x68] sm:$0xff]
    %v187 = vld [vmem:[#allocation2 + $0x70] sm:$0xff]
    %v188 = vld [vmem:[#allocation2 + $0x78] sm:$0xff]
    %v189 = vld [vmem:[#allocation2 + $0x80] sm:$0xff]
    %v190 = vld [vmem:[#allocation2 + $0x88] sm:$0xff]
    %v191 = vld [vmem:[#allocation2 + $0x90] sm:$0xff]
    %v192 = vld [vmem:[#allocation2 + $0x98] sm:$0xff]
    %v193 = vld [vmem:[#allocation2 + $0xa0] sm:$0xff]
    %v194 = vld [vmem:[#allocation2 + $0xa8] sm:$0xff]
    %v195 = vld [vmem:[#allocation2 + $0xb0] sm:$0xff]
    %v196 = vld [vmem:[#allocation2 + $0xb8] sm:$0xff]
    %v197 = vld [vmem:[#allocation2 + $0xc0] sm:$0xff]
    %v198 = vld [vmem:[#allocation2 + $0xc8] sm:$0xff]
    %v199 = vld [vmem:[#allocation2 + $0xd0] sm:$0xff]
    %v200 = vld [vmem:[#allocation2 + $0xd8] sm:$0xff]
    %v201 = vld [vmem:[#allocation2 + $0xe0] sm:$0xff]
    %v202 = vld [vmem:[#allocation2 + $0xe8] sm:$0xff]
    %v203 = vld [vmem:[#allocation2 + $0xf0] sm:$0xff]
    %v204 = vld [vmem:[#allocation2 + $0xf8] sm:$0xff]
    %v205 = vld [vmem:[#allocation2 + $0x100] sm:$0xff]
    %v206 = vld [vmem:[#allocation2 + $0x108] sm:$0xff]
    %v207 = vld [vmem:[#allocation2 + $0x110] sm:$0xff]
    %v208 = vld [vmem:[#allocation2 + $0x118] sm:$0xff]
    %v209 = vld [vmem:[#allocation2 + $0x120] sm:$0xff]
    %v210 = vld [vmem:[#allocation2 + $0x128] sm:$0xff]
    %v211 = vld [vmem:[#allocation2 + $0x130] sm:$0xff]
    %v212 = vld [vmem:[#allocation2 + $0x138] sm:$0xff]
    %v213 = vld [vmem:[#allocation2 + $0x140] sm:$0xff]
    %v214 = vld [vmem:[#allocation2 + $0x148] sm:$0xff]
    %v215 = vld [vmem:[#allocation2 + $0x150] sm:$0xff]
    %v216 = vld [vmem:[#allocation2 + $0x158] sm:$0xff]
    %v217 = vld [vmem:[#allocation2 + $0x160] sm:$0xff]
    %v218 = vld [vmem:[#allocation2 + $0x168] sm:$0xff]
    %v219 = vld [vmem:[#allocation2 + $0x170] sm:$0xff]
    %v220 = vld [vmem:[#allocation2 + $0x178] sm:$0xff]
    %v221 = vld [vmem:[#allocation2 + $0x180] sm:$0xff]
    %v222 = vld [vmem:[#allocation2 + $0x188] sm:$0xff]
    %v223 = vld [vmem:[#allocation2 + $0x190] sm:$0xff]
    %v224 = vld [vmem:[#allocation2 + $0x198] sm:$0xff]
    %v225 = vld [vmem:[#allocation2 + $0x1a0] sm:$0xff]
    %v226 = vld [vmem:[#allocation2 + $0x1a8] sm:$0xff]
    %v227 = vld [vmem:[#allocation2 + $0x1b0] sm:$0xff]
    %v228 = vld [vmem:[#allocation2 + $0x1b8] sm:$0xff]
    %v229 = vld [vmem:[#allocation2 + $0x1c0] sm:$0xff]
    %v230 = vld [vmem:[#allocation2 + $0x1c8] sm:$0xff]
    %v231 = vld [vmem:[#allocation2 + $0x1d0] sm:$0xff]
    %v232 = vld [vmem:[#allocation2 + $0x1d8] sm:$0xff]
    %v233 = vld [vmem:[#allocation2 + $0x1e0] sm:$0xff]
    %v234 = vld [vmem:[#allocation2 + $0x1e8] sm:$0xff]
    %v235 = vld [vmem:[#allocation2 + $0x1f0] sm:$0xff]
    %v236 = vld [vmem:[#allocation2 + $0x1f8] sm:$0xff]
    %v237 = vld [vmem:[#allocation2 + $0x200] sm:$0xff]
    %v238 = vld [vmem:[#allocation2 + $0x208] sm:$0xff]
    %v239 = vld [vmem:[#allocation2 + $0x210] sm:$0xff]
    %v240 = vld [vmem:[#allocation2 + $0x218] sm:$0xff]
    %v241 = vld [vmem:[#allocation2 + $0x220] sm:$0xff]
    %v242 = vld [vmem:[#allocation2 + $0x228] sm:$0xff]
    %v243 = vld [vmem:[#allocation2 + $0x230] sm:$0xff]
    %v244 = vld [vmem:[#allocation2 + $0x238] sm:$0xff]
    %v245 = vld [vmem:[#allocation2 + $0x240] sm:$0xff]
    %v246 = vld [vmem:[#allocation2 + $0x248] sm:$0xff]
    %v247 = vld [vmem:[#allocation2 + $0x250] sm:$0xff]
    %v248 = vld [vmem:[#allocation2 + $0x258] sm:$0xff]
    %v249 = vld [vmem:[#allocation2 + $0x260] sm:$0xff]
    %v250 = vld [vmem:[#allocation2 + $0x268] sm:$0xff]
    %v251 = vld [vmem:[#allocation2 + $0x270] sm:$0xff]
    %v252 = vld [vmem:[#allocation2 + $0x278] sm:$0xff]
    %v253 = vld [vmem:[#allocation2 + $0x280] sm:$0xff]
    %v254 = vld [vmem:[#allocation2 + $0x288] sm:$0xff]
    %v255 = vld [vmem:[#allocation2 + $0x290] sm:$0xff]
    %v256 = vld [vmem:[#allocation2 + $0x298] sm:$0xff]
    %v257 = vld [vmem:[#allocation2 + $0x2a0] sm:$0xff]
    %v258 = vld [vmem:[#allocation2 + $0x2a8] sm:$0xff]
    %v259 = vld [vmem:[#allocation2 + $0x2b0] sm:$0xff]
    %v260 = vld [vmem:[#allocation2 + $0x2b8] sm:$0xff]
    %v261 = vld [vmem:[#allocation2 + $0x2c0] sm:$0xff]
    %v262 = vld [vmem:[#allocation2 + $0x2c8] sm:$0xff]
    %v263 = vld [vmem:[#allocation2 + $0x2d0] sm:$0xff]
    %v264 = vld [vmem:[#allocation2 + $0x2d8] sm:$0xff]
    %v265 = vld [vmem:[#allocation2 + $0x2e0] sm:$0xff]
    %v266 = vld [vmem:[#allocation2 + $0x2e8] sm:$0xff]
    %v267 = vld [vmem:[#allocation2 + $0x2f0] sm:$0xff]
    %v268 = vld [vmem:[#allocation2 + $0x2f8] sm:$0xff]
    %v269 = vld [vmem:[#allocation2 + $0x300] sm:$0xff]
    %v270 = vld [vmem:[#allocation2 + $0x308] sm:$0xff]
    %v271 = vld [vmem:[#allocation2 + $0x310] sm:$0xff]
    %v272 = vld [vmem:[#allocation2 + $0x318] sm:$0xff]
    %v273 = vld [vmem:[#allocation2 + $0x320] sm:$0xff]
    %v274 = vld [vmem:[#allocation2 + $0x328] sm:$0xff]
    %v275 = vld [vmem:[#allocation2 + $0x330] sm:$0xff]
    %v276 = vld [vmem:[#allocation2 + $0x338] sm:$0xff]
    %v277 = vld [vmem:[#allocation2 + $0x340] sm:$0xff]
    %v278 = vld [vmem:[#allocation2 + $0x348] sm:$0xff]
    %v279 = vld [vmem:[#allocation2 + $0x350] sm:$0xff]
    %v280 = vld [vmem:[#allocation2 + $0x358] sm:$0xff]
    %v281 = vld [vmem:[#allocation2 + $0x360] sm:$0xff]
    %v282 = vld [vmem:[#allocation2 + $0x368] sm:$0xff]
    %v283 = vld [vmem:[#allocation2 + $0x370] sm:$0xff]
    %v284 = vld [vmem:[#allocation2 + $0x378] sm:$0xff]
    %v285 = vld [vmem:[#allocation2 + $0x380] sm:$0xff]
    %v286 = vld [vmem:[#allocation2 + $0x388] sm:$0xff]
    %v287 = vld [vmem:[#allocation2 + $0x390] sm:$0xff]
    %v288 = vld [vmem:[#allocation2 + $0x398] sm:$0xff]
    %v289 = vld [vmem:[#allocation2 + $0x3a0] sm:$0xff]
    %v290 = vld [vmem:[#allocation2 + $0x3a8] sm:$0xff]
    %v291 = vld [vmem:[#allocation2 + $0x3b0] sm:$0xff]
    %v292 = vld [vmem:[#allocation2 + $0x3b8] sm:$0xff]
    %v293 = vld [vmem:[#allocation2 + $0x3c0] sm:$0xff]
    %v294 = vld [vmem:[#allocation2 + $0x3c8] sm:$0xff]
    %v295 = vld [vmem:[#allocation2 + $0x3d0] sm:$0xff]
    %v296 = vld [vmem:[#allocation2 + $0x3d8] sm:$0xff]
    %v297 = vld [vmem:[#allocation2 + $0x3e0] sm:$0xff]
    %v298 = vld [vmem:[#allocation2 + $0x3e8] sm:$0xff]
    %v299 = vld [vmem:[#allocation2 + $0x3f0] sm:$0xff]
    %v300 = vld [vmem:[#allocation2 + $0x3f8] sm:$0xff]
    %v301 = vld [vmem:[%s5] sm:$0xff]
    %v303 = vlaneseq
    %v304 = vshrl.u32 %v303, 7
    %v305 = vsub.s32 0, %v304
    %v306 = vrot.slane %v301, %v305
    %v307 = vlaneseq
    %v308 = vshrl.u32 %v307, 7
    %v309 = vsub.s32 1, %v308
    %v310 = vrot.slane %v301, %v309
    %v311 = vlaneseq
    %v312 = vshrl.u32 %v311, 7
    %v313 = vsub.s32 2, %v312
    %v314 = vrot.slane %v301, %v313
    %v315 = vlaneseq
    %v316 = vshrl.u32 %v315, 7
    %v317 = vsub.s32 3, %v316
    %v318 = vrot.slane %v301, %v317
    %v319 = vlaneseq
    %v320 = vshrl.u32 %v319, 7
    %v321 = vsub.s32 4, %v320
    %v322 = vrot.slane %v301, %v321
    %v323 = vlaneseq
    %v324 = vshrl.u32 %v323, 7
    %v325 = vsub.s32 5, %v324
    %v326 = vrot.slane %v301, %v325
    %v327 = vlaneseq
    %v328 = vshrl.u32 %v327, 7
    %v329 = vsub.s32 6, %v328
    %v330 = vrot.slane %v301, %v329
    %v331 = vlaneseq
    %v332 = vshrl.u32 %v331, 7
    %v333 = vsub.s32 7, %v332
    %v334 = vrot.slane %v301, %v333
    %343 = vmatprep.subr.mxu0 %v174
    %344 = vmatpush1.msra.mxu0 %v173
    %345 = vmatprep.subr.mxu0 %v182
    %346 = vmatpush1.msra.mxu0 %v181
    %347 = vmatprep.subr.mxu0 %v190
    %348 = vmatpush1.msra.mxu0 %v189
    %349 = vmatprep.subr.mxu0 %v198
    %350 = vmatpush1.msra.mxu0 %v197
    %351 = vmatprep.subr.mxu0 %v206
    %352 = vmatpush1.msra.mxu0 %v205
    %353 = vmatprep.subr.mxu0 %v214
    %354 = vmatpush1.msra.mxu0 %v213
    %355 = vmatprep.subr.mxu0 %v222
    %356 = vmatpush1.msra.mxu0 %v221
    %357 = vmatprep.subr.mxu0 %v230
    %358 = vmatpush1.msra.mxu0 %v229
    %359 = vmatprep.subr.mxu0 %v238
    %360 = vmatpush1.msra.mxu0 %v237
    %361 = vmatprep.subr.mxu0 %v246
    %362 = vmatpush1.msra.mxu0 %v245
    %363 = vmatprep.subr.mxu0 %v254
    %364 = vmatpush1.msra.mxu0 %v253
    %365 = vmatprep.subr.mxu0 %v262
    %366 = vmatpush1.msra.mxu0 %v261
    %367 = vmatprep.subr.mxu0 %v270
    %368 = vmatpush1.msra.mxu0 %v269
    %369 = vmatprep.subr.mxu0 %v278
    %370 = vmatpush1.msra.mxu0 %v277
    %371 = vmatprep.subr.mxu0 %v286
    %372 = vmatpush1.msra.mxu0 %v285
    %373 = vmatprep.subr.mxu0 %v294
    %374 = vmatpush1.msra.mxu0 %v293
    %375 = vmatprep.subr.mxu0 0.0
    %376 = vmatpush1.msra.mxu0 0.0
    %377 = vmatprep.subr.mxu0 0.0
    %378 = vmatpush1.msra.mxu0 0.0
    %379 = vmatprep.subr.mxu0 0.0
    %380 = vmatpush1.msra.mxu0 0.0
    %381 = vmatprep.subr.mxu0 0.0
    %382 = vmatpush1.msra.mxu0 0.0
    %383 = vmatprep.subr.mxu0 0.0
    %384 = vmatpush1.msra.mxu0 0.0
    %385 = vmatprep.subr.mxu0 0.0
    %386 = vmatpush1.msra.mxu0 0.0
    %387 = vmatprep.subr.mxu0 0.0
    %388 = vmatpush1.msra.mxu0 0.0
    %389 = vmatprep.subr.mxu0 0.0
    %390 = vmatpush1.msra.mxu0 0.0
    %391 = vmatprep.subr.mxu0 0.0
    %392 = vmatpush1.msra.mxu0 0.0
    %393 = vmatprep.subr.mxu0 0.0
    %394 = vmatpush1.msra.mxu0 0.0
    %395 = vmatprep.subr.mxu0 0.0
    %396 = vmatpush1.msra.mxu0 0.0
    %397 = vmatprep.subr.mxu0 0.0
    %398 = vmatpush1.msra.mxu0 0.0
    %399 = vmatprep.subr.mxu0 0.0
    %400 = vmatpush1.msra.mxu0 0.0
    %401 = vmatprep.subr.mxu0 0.0
    %402 = vmatpush1.msra.mxu0 0.0
    %403 = vmatprep.subr.mxu0 0.0
    %404 = vmatpush1.msra.mxu0 0.0
    %405 = vmatprep.subr.mxu0 0.0
    %406 = vmatpush1.msra.mxu0 0.0
    %407 = vmatprep.mubr.f32.mxu0 0.0
    %408 = vmatmul.mubr.f32.gmra.mrb[0].mxu0 %v172
    %v409 = vpop.f32.mrb[0].mxu0
    %v410 = vadd.f32 %v306, %v409
    %v411 = vpop.f32.mrb[0].mxu0
    %v412 = vadd.f32 %v310, %v411
    %413 = vdwg.mxu0
    %414 = vmatprep.subr.mxu0 %v176
    %415 = vmatpush1.msra.mxu0 %v175
    %416 = vmatprep.subr.mxu0 %v184
    %417 = vmatpush1.msra.mxu0 %v183
    %418 = vmatprep.subr.mxu0 %v192
    %419 = vmatpush1.msra.mxu0 %v191
    %420 = vmatprep.subr.mxu0 %v200
    %421 = vmatpush1.msra.mxu0 %v199
    %422 = vmatprep.subr.mxu0 %v208
    %423 = vmatpush1.msra.mxu0 %v207
    %424 = vmatprep.subr.mxu0 %v216
    %425 = vmatpush1.msra.mxu0 %v215
    %426 = vmatprep.subr.mxu0 %v224
    %427 = vmatpush1.msra.mxu0 %v223
    %428 = vmatprep.subr.mxu0 %v232
    %429 = vmatpush1.msra.mxu0 %v231
    %430 = vmatprep.subr.mxu0 %v240
    %431 = vmatpush1.msra.mxu0 %v239
    %432 = vmatprep.subr.mxu0 %v248
    %433 = vmatpush1.msra.mxu0 %v247
    %434 = vmatprep.subr.mxu0 %v256
    %435 = vmatpush1.msra.mxu0 %v255
    %436 = vmatprep.subr.mxu0 %v264
    %437 = vmatpush1.msra.mxu0 %v263
    %438 = vmatprep.subr.mxu0 %v272
    %439 = vmatpush1.msra.mxu0 %v271
    %440 = vmatprep.subr.mxu0 %v280
    %441 = vmatpush1.msra.mxu0 %v279
    %442 = vmatprep.subr.mxu0 %v288
    %443 = vmatpush1.msra.mxu0 %v287
    %444 = vmatprep.subr.mxu0 %v296
    %445 = vmatpush1.msra.mxu0 %v295
    %446 = vmatprep.subr.mxu0 0.0
    %447 = vmatpush1.msra.mxu0 0.0
    %448 = vmatprep.subr.mxu0 0.0
    %449 = vmatpush1.msra.mxu0 0.0
    %450 = vmatprep.subr.mxu0 0.0
    %451 = vmatpush1.msra.mxu0 0.0
    %452 = vmatprep.subr.mxu0 0.0
    %453 = vmatpush1.msra.mxu0 0.0
    %454 = vmatprep.subr.mxu0 0.0
    %455 = vmatpush1.msra.mxu0 0.0
    %456 = vmatprep.subr.mxu0 0.0
    %457 = vmatpush1.msra.mxu0 0.0
    %458 = vmatprep.subr.mxu0 0.0
    %459 = vmatpush1.msra.mxu0 0.0
    %460 = vmatprep.subr.mxu0 0.0
    %461 = vmatpush1.msra.mxu0 0.0
    %462 = vmatprep.subr.mxu0 0.0
    %463 = vmatpush1.msra.mxu0 0.0
    %464 = vmatprep.subr.mxu0 0.0
    %465 = vmatpush1.msra.mxu0 0.0
    %466 = vmatprep.subr.mxu0 0.0
    %467 = vmatpush1.msra.mxu0 0.0
    %468 = vmatprep.subr.mxu0 0.0
    %469 = vmatpush1.msra.mxu0 0.0
    %470 = vmatprep.subr.mxu0 0.0
    %471 = vmatpush1.msra.mxu0 0.0
    %472 = vmatprep.subr.mxu0 0.0
    %473 = vmatpush1.msra.mxu0 0.0
    %474 = vmatprep.subr.mxu0 0.0
    %475 = vmatpush1.msra.mxu0 0.0
    %476 = vmatprep.subr.mxu0 0.0
    %477 = vmatpush1.msra.mxu0 0.0
    %478 = vmatprep.mubr.f32.mxu0 0.0
    %479 = vmatmul.mubr.f32.gmra.mrb[0].mxu0 %v172
    %v480 = vpop.f32.mrb[0].mxu0
    %v481 = vadd.f32 %v314, %v480
    %v482 = vpop.f32.mrb[0].mxu0
    %v483 = vadd.f32 %v318, %v482
    %484 = vdwg.mxu0
    %485 = vmatprep.subr.mxu0 %v178
    %486 = vmatpush1.msra.mxu0 %v177
    %487 = vmatprep.subr.mxu0 %v186
    %488 = vmatpush1.msra.mxu0 %v185
    %489 = vmatprep.subr.mxu0 %v194
    %490 = vmatpush1.msra.mxu0 %v193
    %491 = vmatprep.subr.mxu0 %v202
    %492 = vmatpush1.msra.mxu0 %v201
    %493 = vmatprep.subr.mxu0 %v210
    %494 = vmatpush1.msra.mxu0 %v209
    %495 = vmatprep.subr.mxu0 %v218
    %496 = vmatpush1.msra.mxu0 %v217
    %497 = vmatprep.subr.mxu0 %v226
    %498 = vmatpush1.msra.mxu0 %v225
    %499 = vmatprep.subr.mxu0 %v234
    %500 = vmatpush1.msra.mxu0 %v233
    %501 = vmatprep.subr.mxu0 %v242
    %502 = vmatpush1.msra.mxu0 %v241
    %503 = vmatprep.subr.mxu0 %v250
    %504 = vmatpush1.msra.mxu0 %v249
    %505 = vmatprep.subr.mxu0 %v258
    %506 = vmatpush1.msra.mxu0 %v257
    %507 = vmatprep.subr.mxu0 %v266
    %508 = vmatpush1.msra.mxu0 %v265
    %509 = vmatprep.subr.mxu0 %v274
    %510 = vmatpush1.msra.mxu0 %v273
    %511 = vmatprep.subr.mxu0 %v282
    %512 = vmatpush1.msra.mxu0 %v281
    %513 = vmatprep.subr.mxu0 %v290
    %514 = vmatpush1.msra.mxu0 %v289
    %515 = vmatprep.subr.mxu0 %v298
    %516 = vmatpush1.msra.mxu0 %v297
    %517 = vmatprep.subr.mxu0 0.0
    %518 = vmatpush1.msra.mxu0 0.0
    %519 = vmatprep.subr.mxu0 0.0
    %520 = vmatpush1.msra.mxu0 0.0
    %521 = vmatprep.subr.mxu0 0.0
    %522 = vmatpush1.msra.mxu0 0.0
    %523 = vmatprep.subr.mxu0 0.0
    %524 = vmatpush1.msra.mxu0 0.0
    %525 = vmatprep.subr.mxu0 0.0
    %526 = vmatpush1.msra.mxu0 0.0
    %527 = vmatprep.subr.mxu0 0.0
    %528 = vmatpush1.msra.mxu0 0.0
    %529 = vmatprep.subr.mxu0 0.0
    %530 = vmatpush1.msra.mxu0 0.0
    %531 = vmatprep.subr.mxu0 0.0
    %532 = vmatpush1.msra.mxu0 0.0
    %533 = vmatprep.subr.mxu0 0.0
    %534 = vmatpush1.msra.mxu0 0.0
    %535 = vmatprep.subr.mxu0 0.0
    %536 = vmatpush1.msra.mxu0 0.0
    %537 = vmatprep.subr.mxu0 0.0
    %538 = vmatpush1.msra.mxu0 0.0
    %539 = vmatprep.subr.mxu0 0.0
    %540 = vmatpush1.msra.mxu0 0.0
    %541 = vmatprep.subr.mxu0 0.0
    %542 = vmatpush1.msra.mxu0 0.0
    %543 = vmatprep.subr.mxu0 0.0
    %544 = vmatpush1.msra.mxu0 0.0
    %545 = vmatprep.subr.mxu0 0.0
    %546 = vmatpush1.msra.mxu0 0.0
    %547 = vmatprep.subr.mxu0 0.0
    %548 = vmatpush1.msra.mxu0 0.0
    %549 = vmatprep.mubr.f32.mxu0 0.0
    %550 = vmatmul.mubr.f32.gmra.mrb[0].mxu0 %v172
    %v551 = vpop.f32.mrb[0].mxu0
    %v552 = vadd.f32 %v322, %v551
    %v553 = vpop.f32.mrb[0].mxu0
    %v554 = vadd.f32 %v326, %v553
    %555 = vdwg.mxu0
    %556 = vmatprep.subr.mxu0 %v180
    %557 = vmatpush1.msra.mxu0 %v179
    %558 = vmatprep.subr.mxu0 %v188
    %559 = vmatpush1.msra.mxu0 %v187
    %560 = vmatprep.subr.mxu0 %v196
    %561 = vmatpush1.msra.mxu0 %v195
    %562 = vmatprep.subr.mxu0 %v204
    %563 = vmatpush1.msra.mxu0 %v203
    %564 = vmatprep.subr.mxu0 %v212
    %565 = vmatpush1.msra.mxu0 %v211
    %566 = vmatprep.subr.mxu0 %v220
    %567 = vmatpush1.msra.mxu0 %v219
    %568 = vmatprep.subr.mxu0 %v228
    %569 = vmatpush1.msra.mxu0 %v227
    %570 = vmatprep.subr.mxu0 %v236
    %571 = vmatpush1.msra.mxu0 %v235
    %572 = vmatprep.subr.mxu0 %v244
    %573 = vmatpush1.msra.mxu0 %v243
    %574 = vmatprep.subr.mxu0 %v252
    %575 = vmatpush1.msra.mxu0 %v251
    %576 = vmatprep.subr.mxu0 %v260
    %577 = vmatpush1.msra.mxu0 %v259
    %578 = vmatprep.subr.mxu0 %v268
    %579 = vmatpush1.msra.mxu0 %v267
    %580 = vmatprep.subr.mxu0 %v276
    %581 = vmatpush1.msra.mxu0 %v275
    %582 = vmatprep.subr.mxu0 %v284
    %583 = vmatpush1.msra.mxu0 %v283
    %584 = vmatprep.subr.mxu0 %v292
    %585 = vmatpush1.msra.mxu0 %v291
    %586 = vmatprep.subr.mxu0 %v300
    %587 = vmatpush1.msra.mxu0 %v299
    %588 = vmatprep.subr.mxu0 0.0
    %589 = vmatpush1.msra.mxu0 0.0
    %590 = vmatprep.subr.mxu0 0.0
    %591 = vmatpush1.msra.mxu0 0.0
    %592 = vmatprep.subr.mxu0 0.0
    %593 = vmatpush1.msra.mxu0 0.0
    %594 = vmatprep.subr.mxu0 0.0
    %595 = vmatpush1.msra.mxu0 0.0
    %596 = vmatprep.subr.mxu0 0.0
    %597 = vmatpush1.msra.mxu0 0.0
    %598 = vmatprep.subr.mxu0 0.0
    %599 = vmatpush1.msra.mxu0 0.0
    %600 = vmatprep.subr.mxu0 0.0
    %601 = vmatpush1.msra.mxu0 0.0
    %602 = vmatprep.subr.mxu0 0.0
    %603 = vmatpush1.msra.mxu0 0.0
    %604 = vmatprep.subr.mxu0 0.0
    %605 = vmatpush1.msra.mxu0 0.0
    %606 = vmatprep.subr.mxu0 0.0
    %607 = vmatpush1.msra.mxu0 0.0
    %608 = vmatprep.subr.mxu0 0.0
    %609 = vmatpush1.msra.mxu0 0.0
    %610 = vmatprep.subr.mxu0 0.0
    %611 = vmatpush1.msra.mxu0 0.0
    %612 = vmatprep.subr.mxu0 0.0
    %613 = vmatpush1.msra.mxu0 0.0
    %614 = vmatprep.subr.mxu0 0.0
    %615 = vmatpush1.msra.mxu0 0.0
    %616 = vmatprep.subr.mxu0 0.0
    %617 = vmatpush1.msra.mxu0 0.0
    %618 = vmatprep.subr.mxu0 0.0
    %619 = vmatpush1.msra.mxu0 0.0
    %620 = vmatprep.mubr.f32.mxu0 0.0
    %621 = vmatmul.mubr.f32.gmra.mrb[0].mxu0 %v172
    %v622 = vpop.f32.mrb[0].mxu0
    %v623 = vadd.f32 %v330, %v622
    %v624 = vpop.f32.mrb[0].mxu0
    %v625 = vadd.f32 %v334, %v624
    %626 = vdwg.mxu0
    %v627 = vmax.f32 %v410, 0.0
    %v628 = vmax.f32 %v412, 0.0
    %v629 = vmax.f32 %v481, 0.0
    %v630 = vmax.f32 %v483, 0.0
    %v631 = vmax.f32 %v552, 0.0
    %v632 = vmax.f32 %v554, 0.0
    %v633 = vmax.f32 %v623, 0.0
    %v634 = vmax.f32 %v625, 0.0
    %v635 = vld [vmem:[#allocation5] sm:$0xff]
    %v636 = vld [vmem:[#allocation5 + $0x8] sm:$0xff]
    %v637 = vld [vmem:[#allocation5 + $0x10] sm:$0xff]
    %v638 = vld [vmem:[#allocation5 + $0x18] sm:$0xff]
    %v639 = vld [vmem:[#allocation5 + $0x20] sm:$0xff]
    %v640 = vld [vmem:[#allocation5 + $0x28] sm:$0xff]
    %v641 = vld [vmem:[#allocation5 + $0x30] sm:$0xff]
    %v642 = vld [vmem:[#allocation5 + $0x38] sm:$0xff]
    %v643 = vld [vmem:[#allocation5 + $0x40] sm:$0xff]
    %v644 = vld [vmem:[#allocation5 + $0x48] sm:$0xff]
    %v645 = vld [vmem:[#allocation5 + $0x50] sm:$0xff]
    %v646 = vld [vmem:[#allocation5 + $0x58] sm:$0xff]
    %v647 = vld [vmem:[#allocation5 + $0x60] sm:$0xff]
    %v648 = vld [vmem:[#allocation5 + $0x68] sm:$0xff]
    %v649 = vld [vmem:[#allocation5 + $0x70] sm:$0xff]
    %v650 = vld [vmem:[#allocation5 + $0x78] sm:$0xff]
    %v651 = vld [vmem:[#allocation5 + $0x80] sm:$0xff]
    %v652 = vld [vmem:[#allocation5 + $0x88] sm:$0xff]
    %v653 = vld [vmem:[#allocation5 + $0x90] sm:$0xff]
    %v654 = vld [vmem:[#allocation5 + $0x98] sm:$0xff]
    %v655 = vld [vmem:[#allocation5 + $0xa0] sm:$0xff]
    %v656 = vld [vmem:[#allocation5 + $0xa8] sm:$0xff]
    %v657 = vld [vmem:[#allocation5 + $0xb0] sm:$0xff]
    %v658 = vld [vmem:[#allocation5 + $0xb8] sm:$0xff]
    %v659 = vld [vmem:[#allocation5 + $0xc0] sm:$0xff]
    %v660 = vld [vmem:[#allocation5 + $0xc8] sm:$0xff]
    %v661 = vld [vmem:[#allocation5 + $0xd0] sm:$0xff]
    %v662 = vld [vmem:[#allocation5 + $0xd8] sm:$0xff]
    %v663 = vld [vmem:[#allocation5 + $0xe0] sm:$0xff]
    %v664 = vld [vmem:[#allocation5 + $0xe8] sm:$0xff]
    %v665 = vld [vmem:[#allocation5 + $0xf0] sm:$0xff]
    %v666 = vld [vmem:[#allocation5 + $0xf8] sm:$0xff]
    %v667 = vld [vmem:[#allocation5 + $0x100] sm:$0xff]
    %v668 = vld [vmem:[#allocation5 + $0x108] sm:$0xff]
    %v669 = vld [vmem:[#allocation5 + $0x110] sm:$0xff]
    %v670 = vld [vmem:[#allocation5 + $0x118] sm:$0xff]
    %v671 = vld [vmem:[#allocation5 + $0x120] sm:$0xff]
    %v672 = vld [vmem:[#allocation5 + $0x128] sm:$0xff]
    %v673 = vld [vmem:[#allocation5 + $0x130] sm:$0xff]
    %v674 = vld [vmem:[#allocation5 + $0x138] sm:$0xff]
    %v675 = vld [vmem:[#allocation5 + $0x140] sm:$0xff]
    %v676 = vld [vmem:[#allocation5 + $0x148] sm:$0xff]
    %v677 = vld [vmem:[#allocation5 + $0x150] sm:$0xff]
    %v678 = vld [vmem:[#allocation5 + $0x158] sm:$0xff]
    %v679 = vld [vmem:[#allocation5 + $0x160] sm:$0xff]
    %v680 = vld [vmem:[#allocation5 + $0x168] sm:$0xff]
    %v681 = vld [vmem:[#allocation5 + $0x170] sm:$0xff]
    %v682 = vld [vmem:[#allocation5 + $0x178] sm:$0xff]
    %v683 = vld [vmem:[#allocation5 + $0x180] sm:$0xff]
    %v684 = vld [vmem:[#allocation5 + $0x188] sm:$0xff]
    %v685 = vld [vmem:[#allocation5 + $0x190] sm:$0xff]
    %v686 = vld [vmem:[#allocation5 + $0x198] sm:$0xff]
    %v687 = vld [vmem:[#allocation5 + $0x1a0] sm:$0xff]
    %v688 = vld [vmem:[#allocation5 + $0x1a8] sm:$0xff]
    %v689 = vld [vmem:[#allocation5 + $0x1b0] sm:$0xff]
    %v690 = vld [vmem:[#allocation5 + $0x1b8] sm:$0xff]
    %v691 = vld [vmem:[#allocation5 + $0x1c0] sm:$0xff]
    %v692 = vld [vmem:[#allocation5 + $0x1c8] sm:$0xff]
    %v693 = vld [vmem:[#allocation5 + $0x1d0] sm:$0xff]
    %v694 = vld [vmem:[#allocation5 + $0x1d8] sm:$0xff]
    %v695 = vld [vmem:[#allocation5 + $0x1e0] sm:$0xff]
    %v696 = vld [vmem:[#allocation5 + $0x1e8] sm:$0xff]
    %v697 = vld [vmem:[#allocation5 + $0x1f0] sm:$0xff]
    %v698 = vld [vmem:[#allocation5 + $0x1f8] sm:$0xff]
    %v699 = vld [vmem:[#allocation5 + $0x200] sm:$0xff]
    %v700 = vld [vmem:[#allocation5 + $0x208] sm:$0xff]
    %v701 = vld [vmem:[#allocation5 + $0x210] sm:$0xff]
    %v702 = vld [vmem:[#allocation5 + $0x218] sm:$0xff]
    %v703 = vld [vmem:[#allocation5 + $0x220] sm:$0xff]
    %v704 = vld [vmem:[#allocation5 + $0x228] sm:$0xff]
    %v705 = vld [vmem:[#allocation5 + $0x230] sm:$0xff]
    %v706 = vld [vmem:[#allocation5 + $0x238] sm:$0xff]
    %v707 = vld [vmem:[#allocation5 + $0x240] sm:$0xff]
    %v708 = vld [vmem:[#allocation5 + $0x248] sm:$0xff]
    %v709 = vld [vmem:[#allocation5 + $0x250] sm:$0xff]
    %v710 = vld [vmem:[#allocation5 + $0x258] sm:$0xff]
    %v711 = vld [vmem:[#allocation5 + $0x260] sm:$0xff]
    %v712 = vld [vmem:[#allocation5 + $0x268] sm:$0xff]
    %v713 = vld [vmem:[#allocation5 + $0x270] sm:$0xff]
    %v714 = vld [vmem:[#allocation5 + $0x278] sm:$0xff]
    %v715 = vld [vmem:[#allocation5 + $0x280] sm:$0xff]
    %v716 = vld [vmem:[#allocation5 + $0x288] sm:$0xff]
    %v717 = vld [vmem:[#allocation5 + $0x290] sm:$0xff]
    %v718 = vld [vmem:[#allocation5 + $0x298] sm:$0xff]
    %v719 = vld [vmem:[#allocation5 + $0x2a0] sm:$0xff]
    %v720 = vld [vmem:[#allocation5 + $0x2a8] sm:$0xff]
    %v721 = vld [vmem:[#allocation5 + $0x2b0] sm:$0xff]
    %v722 = vld [vmem:[#allocation5 + $0x2b8] sm:$0xff]
    %v723 = vld [vmem:[#allocation5 + $0x2c0] sm:$0xff]
    %v724 = vld [vmem:[#allocation5 + $0x2c8] sm:$0xff]
    %v725 = vld [vmem:[#allocation5 + $0x2d0] sm:$0xff]
    %v726 = vld [vmem:[#allocation5 + $0x2d8] sm:$0xff]
    %v727 = vld [vmem:[#allocation5 + $0x2e0] sm:$0xff]
    %v728 = vld [vmem:[#allocation5 + $0x2e8] sm:$0xff]
    %v729 = vld [vmem:[#allocation5 + $0x2f0] sm:$0xff]
    %v730 = vld [vmem:[#allocation5 + $0x2f8] sm:$0xff]
    %v731 = vld [vmem:[#allocation5 + $0x300] sm:$0xff]
    %v732 = vld [vmem:[#allocation5 + $0x308] sm:$0xff]
    %v733 = vld [vmem:[#allocation5 + $0x310] sm:$0xff]
    %v734 = vld [vmem:[#allocation5 + $0x318] sm:$0xff]
    %v735 = vld [vmem:[#allocation5 + $0x320] sm:$0xff]
    %v736 = vld [vmem:[#allocation5 + $0x328] sm:$0xff]
    %v737 = vld [vmem:[#allocation5 + $0x330] sm:$0xff]
    %v738 = vld [vmem:[#allocation5 + $0x338] sm:$0xff]
    %v739 = vld [vmem:[#allocation5 + $0x340] sm:$0xff]
    %v740 = vld [vmem:[#allocation5 + $0x348] sm:$0xff]
    %v741 = vld [vmem:[#allocation5 + $0x350] sm:$0xff]
    %v742 = vld [vmem:[#allocation5 + $0x358] sm:$0xff]
    %v743 = vld [vmem:[#allocation5 + $0x360] sm:$0xff]
    %v744 = vld [vmem:[#allocation5 + $0x368] sm:$0xff]
    %v745 = vld [vmem:[#allocation5 + $0x370] sm:$0xff]
    %v746 = vld [vmem:[#allocation5 + $0x378] sm:$0xff]
    %v747 = vld [vmem:[#allocation5 + $0x380] sm:$0xff]
    %v748 = vld [vmem:[#allocation5 + $0x388] sm:$0xff]
    %v749 = vld [vmem:[#allocation5 + $0x390] sm:$0xff]
    %v750 = vld [vmem:[#allocation5 + $0x398] sm:$0xff]
    %v751 = vld [vmem:[#allocation5 + $0x3a0] sm:$0xff]
    %v752 = vld [vmem:[#allocation5 + $0x3a8] sm:$0xff]
    %v753 = vld [vmem:[#allocation5 + $0x3b0] sm:$0xff]
    %v754 = vld [vmem:[#allocation5 + $0x3b8] sm:$0xff]
    %v755 = vld [vmem:[#allocation5 + $0x3c0] sm:$0xff]
    %v756 = vld [vmem:[#allocation5 + $0x3c8] sm:$0xff]
    %v757 = vld [vmem:[#allocation5 + $0x3d0] sm:$0xff]
    %v758 = vld [vmem:[#allocation5 + $0x3d8] sm:$0xff]
    %v759 = vld [vmem:[#allocation5 + $0x3e0] sm:$0xff]
    %v760 = vld [vmem:[#allocation5 + $0x3e8] sm:$0xff]
    %v761 = vld [vmem:[#allocation5 + $0x3f0] sm:$0xff]
    %v762 = vld [vmem:[#allocation5 + $0x3f8] sm:$0xff]
    %v763 = vld [vmem:[%s7] sm:$0x1]
    %v765 = vlaneseq
    %v766 = vshrl.u32 %v765, 7
    %v767 = vsub.s32 0, %v766
    %v768 = vrot.slane %v763, %v767
    %770 = vmatprep.subr.mxu0 0.0
    %771 = vmatpush1.msra.mxu0 %v635
    %772 = vmatprep.subr.mxu0 0.0
    %773 = vmatpush1.msra.mxu0 %v636
    %774 = vmatprep.subr.mxu0 0.0
    %775 = vmatpush1.msra.mxu0 %v637
    %776 = vmatprep.subr.mxu0 0.0
    %777 = vmatpush1.msra.mxu0 %v638
    %778 = vmatprep.subr.mxu0 0.0
    %779 = vmatpush1.msra.mxu0 %v639
    %780 = vmatprep.subr.mxu0 0.0
    %781 = vmatpush1.msra.mxu0 %v640
    %782 = vmatprep.subr.mxu0 0.0
    %783 = vmatpush1.msra.mxu0 %v641
    %784 = vmatprep.subr.mxu0 0.0
    %785 = vmatpush1.msra.mxu0 %v642
    %786 = vmatprep.subr.mxu0 0.0
    %787 = vmatpush1.msra.mxu0 %v643
    %788 = vmatprep.subr.mxu0 0.0
    %789 = vmatpush1.msra.mxu0 %v644
    %790 = vmatprep.subr.mxu0 0.0
    %791 = vmatpush1.msra.mxu0 %v645
    %792 = vmatprep.subr.mxu0 0.0
    %793 = vmatpush1.msra.mxu0 %v646
    %794 = vmatprep.subr.mxu0 0.0
    %795 = vmatpush1.msra.mxu0 %v647
    %796 = vmatprep.subr.mxu0 0.0
    %797 = vmatpush1.msra.mxu0 %v648
    %798 = vmatprep.subr.mxu0 0.0
    %799 = vmatpush1.msra.mxu0 %v649
    %800 = vmatprep.subr.mxu0 0.0
    %801 = vmatpush1.msra.mxu0 %v650
    %802 = vmatprep.subr.mxu0 0.0
    %803 = vmatpush1.msra.mxu0 %v651
    %804 = vmatprep.subr.mxu0 0.0
    %805 = vmatpush1.msra.mxu0 %v652
    %806 = vmatprep.subr.mxu0 0.0
    %807 = vmatpush1.msra.mxu0 %v653
    %808 = vmatprep.subr.mxu0 0.0
    %809 = vmatpush1.msra.mxu0 %v654
    %810 = vmatprep.subr.mxu0 0.0
    %811 = vmatpush1.msra.mxu0 %v655
    %812 = vmatprep.subr.mxu0 0.0
    %813 = vmatpush1.msra.mxu0 %v656
    %814 = vmatprep.subr.mxu0 0.0
    %815 = vmatpush1.msra.mxu0 %v657
    %816 = vmatprep.subr.mxu0 0.0
    %817 = vmatpush1.msra.mxu0 %v658
    %818 = vmatprep.subr.mxu0 0.0
    %819 = vmatpush1.msra.mxu0 %v659
    %820 = vmatprep.subr.mxu0 0.0
    %821 = vmatpush1.msra.mxu0 %v660
    %822 = vmatprep.subr.mxu0 0.0
    %823 = vmatpush1.msra.mxu0 %v661
    %824 = vmatprep.subr.mxu0 0.0
    %825 = vmatpush1.msra.mxu0 %v662
    %826 = vmatprep.subr.mxu0 0.0
    %827 = vmatpush1.msra.mxu0 %v663
    %828 = vmatprep.subr.mxu0 0.0
    %829 = vmatpush1.msra.mxu0 %v664
    %830 = vmatprep.subr.mxu0 0.0
    %831 = vmatpush1.msra.mxu0 %v665
    %832 = vmatprep.subr.mxu0 0.0
    %833 = vmatpush1.msra.mxu0 %v666
    %834 = vmatprep.mubr.f32.mxu0 %v628
    %835 = vmatmul.mubr.f32.gmra.mrb[0].mxu0 %v627
    %v836 = vpop.f32.mrb[0].mxu0
    %v837 = vadd.f32 %v768, %v836
    %v838 = vpop.f32.mrb[0].mxu0
    %839 = vdwg.mxu0
    %840 = vmatprep.subr.mxu0 0.0
    %841 = vmatpush1.msra.mxu0 %v667
    %842 = vmatprep.subr.mxu0 0.0
    %843 = vmatpush1.msra.mxu0 %v668
    %844 = vmatprep.subr.mxu0 0.0
    %845 = vmatpush1.msra.mxu0 %v669
    %846 = vmatprep.subr.mxu0 0.0
    %847 = vmatpush1.msra.mxu0 %v670
    %848 = vmatprep.subr.mxu0 0.0
    %849 = vmatpush1.msra.mxu0 %v671
    %850 = vmatprep.subr.mxu0 0.0
    %851 = vmatpush1.msra.mxu0 %v672
    %852 = vmatprep.subr.mxu0 0.0
    %853 = vmatpush1.msra.mxu0 %v673
    %854 = vmatprep.subr.mxu0 0.0
    %855 = vmatpush1.msra.mxu0 %v674
    %856 = vmatprep.subr.mxu0 0.0
    %857 = vmatpush1.msra.mxu0 %v675
    %858 = vmatprep.subr.mxu0 0.0
    %859 = vmatpush1.msra.mxu0 %v676
    %860 = vmatprep.subr.mxu0 0.0
    %861 = vmatpush1.msra.mxu0 %v677
    %862 = vmatprep.subr.mxu0 0.0
    %863 = vmatpush1.msra.mxu0 %v678
    %864 = vmatprep.subr.mxu0 0.0
    %865 = vmatpush1.msra.mxu0 %v679
    %866 = vmatprep.subr.mxu0 0.0
    %867 = vmatpush1.msra.mxu0 %v680
    %868 = vmatprep.subr.mxu0 0.0
    %869 = vmatpush1.msra.mxu0 %v681
    %870 = vmatprep.subr.mxu0 0.0
    %871 = vmatpush1.msra.mxu0 %v682
    %872 = vmatprep.subr.mxu0 0.0
    %873 = vmatpush1.msra.mxu0 %v683
    %874 = vmatprep.subr.mxu0 0.0
    %875 = vmatpush1.msra.mxu0 %v684
    %876 = vmatprep.subr.mxu0 0.0
    %877 = vmatpush1.msra.mxu0 %v685
    %878 = vmatprep.subr.mxu0 0.0
    %879 = vmatpush1.msra.mxu0 %v686
    %880 = vmatprep.subr.mxu0 0.0
    %881 = vmatpush1.msra.mxu0 %v687
    %882 = vmatprep.subr.mxu0 0.0
    %883 = vmatpush1.msra.mxu0 %v688
    %884 = vmatprep.subr.mxu0 0.0
    %885 = vmatpush1.msra.mxu0 %v689
    %886 = vmatprep.subr.mxu0 0.0
    %887 = vmatpush1.msra.mxu0 %v690
    %888 = vmatprep.subr.mxu0 0.0
    %889 = vmatpush1.msra.mxu0 %v691
    %890 = vmatprep.subr.mxu0 0.0
    %891 = vmatpush1.msra.mxu0 %v692
    %892 = vmatprep.subr.mxu0 0.0
    %893 = vmatpush1.msra.mxu0 %v693
    %894 = vmatprep.subr.mxu0 0.0
    %895 = vmatpush1.msra.mxu0 %v694
    %896 = vmatprep.subr.mxu0 0.0
    %897 = vmatpush1.msra.mxu0 %v695
    %898 = vmatprep.subr.mxu0 0.0
    %899 = vmatpush1.msra.mxu0 %v696
    %900 = vmatprep.subr.mxu0 0.0
    %901 = vmatpush1.msra.mxu0 %v697
    %902 = vmatprep.subr.mxu0 0.0
    %903 = vmatpush1.msra.mxu0 %v698
    %904 = vmatprep.mubr.f32.mxu0 %v630
    %905 = vmatmul.mubr.f32.gmra.mrb[0].mxu0 %v629
    %v906 = vpop.f32.mrb[0].mxu0
    %v907 = vadd.f32 %v837, %v906
    %v908 = vpop.f32.mrb[0].mxu0
    %909 = vdwg.mxu0
    %910 = vmatprep.subr.mxu0 0.0
    %911 = vmatpush1.msra.mxu0 %v699
    %912 = vmatprep.subr.mxu0 0.0
    %913 = vmatpush1.msra.mxu0 %v700
    %914 = vmatprep.subr.mxu0 0.0
    %915 = vmatpush1.msra.mxu0 %v701
    %916 = vmatprep.subr.mxu0 0.0
    %917 = vmatpush1.msra.mxu0 %v702
    %918 = vmatprep.subr.mxu0 0.0
    %919 = vmatpush1.msra.mxu0 %v703
    %920 = vmatprep.subr.mxu0 0.0
    %921 = vmatpush1.msra.mxu0 %v704
    %922 = vmatprep.subr.mxu0 0.0
    %923 = vmatpush1.msra.mxu0 %v705
    %924 = vmatprep.subr.mxu0 0.0
    %925 = vmatpush1.msra.mxu0 %v706
    %926 = vmatprep.subr.mxu0 0.0
    %927 = vmatpush1.msra.mxu0 %v707
    %928 = vmatprep.subr.mxu0 0.0
    %929 = vmatpush1.msra.mxu0 %v708
    %930 = vmatprep.subr.mxu0 0.0
    %931 = vmatpush1.msra.mxu0 %v709
    %932 = vmatprep.subr.mxu0 0.0
    %933 = vmatpush1.msra.mxu0 %v710
    %934 = vmatprep.subr.mxu0 0.0
    %935 = vmatpush1.msra.mxu0 %v711
    %936 = vmatprep.subr.mxu0 0.0
    %937 = vmatpush1.msra.mxu0 %v712
    %938 = vmatprep.subr.mxu0 0.0
    %939 = vmatpush1.msra.mxu0 %v713
    %940 = vmatprep.subr.mxu0 0.0
    %941 = vmatpush1.msra.mxu0 %v714
    %942 = vmatprep.subr.mxu0 0.0
    %943 = vmatpush1.msra.mxu0 %v715
    %944 = vmatprep.subr.mxu0 0.0
    %945 = vmatpush1.msra.mxu0 %v716
    %946 = vmatprep.subr.mxu0 0.0
    %947 = vmatpush1.msra.mxu0 %v717
    %948 = vmatprep.subr.mxu0 0.0
    %949 = vmatpush1.msra.mxu0 %v718
    %950 = vmatprep.subr.mxu0 0.0
    %951 = vmatpush1.msra.mxu0 %v719
    %952 = vmatprep.subr.mxu0 0.0
    %953 = vmatpush1.msra.mxu0 %v720
    %954 = vmatprep.subr.mxu0 0.0
    %955 = vmatpush1.msra.mxu0 %v721
    %956 = vmatprep.subr.mxu0 0.0
    %957 = vmatpush1.msra.mxu0 %v722
    %958 = vmatprep.subr.mxu0 0.0
    %959 = vmatpush1.msra.mxu0 %v723
    %960 = vmatprep.subr.mxu0 0.0
    %961 = vmatpush1.msra.mxu0 %v724
    %962 = vmatprep.subr.mxu0 0.0
    %963 = vmatpush1.msra.mxu0 %v725
    %964 = vmatprep.subr.mxu0 0.0
    %965 = vmatpush1.msra.mxu0 %v726
    %966 = vmatprep.subr.mxu0 0.0
    %967 = vmatpush1.msra.mxu0 %v727
    %968 = vmatprep.subr.mxu0 0.0
    %969 = vmatpush1.msra.mxu0 %v728
    %970 = vmatprep.subr.mxu0 0.0
    %971 = vmatpush1.msra.mxu0 %v729
    %972 = vmatprep.subr.mxu0 0.0
    %973 = vmatpush1.msra.mxu0 %v730
    %974 = vmatprep.mubr.f32.mxu0 %v632
    %975 = vmatmul.mubr.f32.gmra.mrb[0].mxu0 %v631
    %v976 = vpop.f32.mrb[0].mxu0
    %v977 = vadd.f32 %v907, %v976
    %v978 = vpop.f32.mrb[0].mxu0
    %979 = vdwg.mxu0
    %980 = vmatprep.subr.mxu0 0.0
    %981 = vmatpush1.msra.mxu0 %v731
    %982 = vmatprep.subr.mxu0 0.0
    %983 = vmatpush1.msra.mxu0 %v732
    %984 = vmatprep.subr.mxu0 0.0
    %985 = vmatpush1.msra.mxu0 %v733
    %986 = vmatprep.subr.mxu0 0.0
    %987 = vmatpush1.msra.mxu0 %v734
    %988 = vmatprep.subr.mxu0 0.0
    %989 = vmatpush1.msra.mxu0 %v735
    %990 = vmatprep.subr.mxu0 0.0
    %991 = vmatpush1.msra.mxu0 %v736
    %992 = vmatprep.subr.mxu0 0.0
    %993 = vmatpush1.msra.mxu0 %v737
    %994 = vmatprep.subr.mxu0 0.0
    %995 = vmatpush1.msra.mxu0 %v738
    %996 = vmatprep.subr.mxu0 0.0
    %997 = vmatpush1.msra.mxu0 %v739
    %998 = vmatprep.subr.mxu0 0.0
    %999 = vmatpush1.msra.mxu0 %v740
    %1000 = vmatprep.subr.mxu0 0.0
    %1001 = vmatpush1.msra.mxu0 %v741
    %1002 = vmatprep.subr.mxu0 0.0
    %1003 = vmatpush1.msra.mxu0 %v742
    %1004 = vmatprep.subr.mxu0 0.0
    %1005 = vmatpush1.msra.mxu0 %v743
    %1006 = vmatprep.subr.mxu0 0.0
    %1007 = vmatpush1.msra.mxu0 %v744
    %1008 = vmatprep.subr.mxu0 0.0
    %1009 = vmatpush1.msra.mxu0 %v745
    %1010 = vmatprep.subr.mxu0 0.0
    %1011 = vmatpush1.msra.mxu0 %v746
    %1012 = vmatprep.subr.mxu0 0.0
    %1013 = vmatpush1.msra.mxu0 %v747
    %1014 = vmatprep.subr.mxu0 0.0
    %1015 = vmatpush1.msra.mxu0 %v748
    %1016 = vmatprep.subr.mxu0 0.0
    %1017 = vmatpush1.msra.mxu0 %v749
    %1018 = vmatprep.subr.mxu0 0.0
    %1019 = vmatpush1.msra.mxu0 %v750
    %1020 = vmatprep.subr.mxu0 0.0
    %1021 = vmatpush1.msra.mxu0 %v751
    %1022 = vmatprep.subr.mxu0 0.0
    %1023 = vmatpush1.msra.mxu0 %v752
    %1024 = vmatprep.subr.mxu0 0.0
    %1025 = vmatpush1.msra.mxu0 %v753
    %1026 = vmatprep.subr.mxu0 0.0
    %1027 = vmatpush1.msra.mxu0 %v754
    %1028 = vmatprep.subr.mxu0 0.0
    %1029 = vmatpush1.msra.mxu0 %v755
    %1030 = vmatprep.subr.mxu0 0.0
    %1031 = vmatpush1.msra.mxu0 %v756
    %1032 = vmatprep.subr.mxu0 0.0
    %1033 = vmatpush1.msra.mxu0 %v757
    %1034 = vmatprep.subr.mxu0 0.0
    %1035 = vmatpush1.msra.mxu0 %v758
    %1036 = vmatprep.subr.mxu0 0.0
    %1037 = vmatpush1.msra.mxu0 %v759
    %1038 = vmatprep.subr.mxu0 0.0
    %1039 = vmatpush1.msra.mxu0 %v760
    %1040 = vmatprep.subr.mxu0 0.0
    %1041 = vmatpush1.msra.mxu0 %v761
    %1042 = vmatprep.subr.mxu0 0.0
    %1043 = vmatpush1.msra.mxu0 %v762
    %1044 = vmatprep.mubr.f32.mxu0 %v634
    %1045 = vmatmul.mubr.f32.gmra.mrb[0].mxu0 %v633
    %v1046 = vpop.f32.mrb[0].mxu0
    %v1047 = vadd.f32 %v977, %v1046
    %v1048 = vpop.f32.mrb[0].mxu0
    %1049 = vdwg.mxu0
    %v1050 = vmax.f32 %v1047, 0.0
    %v1051 = vld [vmem:[%s1] sm:$0x3]
    %v1052 = vld [vmem:[%s8] sm:$0x3]
    %v1053 = vld [vmem:[%s9] sm:$0x1]
    %v1055 = vlaneseq
    %v1056 = vshrl.u32 %v1055, 7
    %v1057 = vsub.s32 0, %v1056
    %v1058 = vrot.slane %v1053, %v1057
    %vm1060 = vcmask 15360
    %v1062 = vsel %vm1060, %v1051, 0
    %vm1064 = vcmask 1041408
    %v1066 = vsel %vm1064, %v1052, 0
    %1068 = vmatprep.subr.mxu0 0.0
    %1069 = vmatpush1.msra.mxu0 %v1066
    %1070 = vmatprep.subr.mxu0 0.0
    %1071 = vmatpush1.msra.mxu0 0.0
    %1072 = vmatprep.subr.mxu0 0.0
    %1073 = vmatpush1.msra.mxu0 0.0
    %1074 = vmatprep.subr.mxu0 0.0
    %1075 = vmatpush1.msra.mxu0 0.0
    %1076 = vmatprep.subr.mxu0 0.0
    %1077 = vmatpush1.msra.mxu0 0.0
    %1078 = vmatprep.subr.mxu0 0.0
    %1079 = vmatpush1.msra.mxu0 0.0
    %1080 = vmatprep.subr.mxu0 0.0
    %1081 = vmatpush1.msra.mxu0 0.0
    %1082 = vmatprep.subr.mxu0 0.0
    %1083 = vmatpush1.msra.mxu0 0.0
    %1084 = vmatprep.subr.mxu0 0.0
    %1085 = vmatpush1.msra.mxu0 0.0
    %1086 = vmatprep.subr.mxu0 0.0
    %1087 = vmatpush1.msra.mxu0 0.0
    %1088 = vmatprep.subr.mxu0 0.0
    %1089 = vmatpush1.msra.mxu0 0.0
    %1090 = vmatprep.subr.mxu0 0.0
    %1091 = vmatpush1.msra.mxu0 0.0
    %1092 = vmatprep.subr.mxu0 0.0
    %1093 = vmatpush1.msra.mxu0 0.0
    %1094 = vmatprep.subr.mxu0 0.0
    %1095 = vmatpush1.msra.mxu0 0.0
    %1096 = vmatprep.subr.mxu0 0.0
    %1097 = vmatpush1.msra.mxu0 0.0
    %1098 = vmatprep.subr.mxu0 0.0
    %1099 = vmatpush1.msra.mxu0 0.0
    %1100 = vmatprep.subr.mxu0 0.0
    %1101 = vmatpush1.msra.mxu0 0.0
    %1102 = vmatprep.subr.mxu0 0.0
    %1103 = vmatpush1.msra.mxu0 0.0
    %1104 = vmatprep.subr.mxu0 0.0
    %1105 = vmatpush1.msra.mxu0 0.0
    %1106 = vmatprep.subr.mxu0 0.0
    %1107 = vmatpush1.msra.mxu0 0.0
    %1108 = vmatprep.subr.mxu0 0.0
    %1109 = vmatpush1.msra.mxu0 0.0
    %1110 = vmatprep.subr.mxu0 0.0
    %1111 = vmatpush1.msra.mxu0 0.0
    %1112 = vmatprep.subr.mxu0 0.0
    %1113 = vmatpush1.msra.mxu0 0.0
    %1114 = vmatprep.subr.mxu0 0.0
    %1115 = vmatpush1.msra.mxu0 0.0
    %1116 = vmatprep.subr.mxu0 0.0
    %1117 = vmatpush1.msra.mxu0 0.0
    %1118 = vmatprep.subr.mxu0 0.0
    %1119 = vmatpush1.msra.mxu0 0.0
    %1120 = vmatprep.subr.mxu0 0.0
    %1121 = vmatpush1.msra.mxu0 0.0
    %1122 = vmatprep.subr.mxu0 0.0
    %1123 = vmatpush1.msra.mxu0 0.0
    %1124 = vmatprep.subr.mxu0 0.0
    %1125 = vmatpush1.msra.mxu0 0.0
    %1126 = vmatprep.subr.mxu0 0.0
    %1127 = vmatpush1.msra.mxu0 0.0
    %1128 = vmatprep.subr.mxu0 0.0
    %1129 = vmatpush1.msra.mxu0 0.0
    %1130 = vmatprep.subr.mxu0 0.0
    %1131 = vmatpush1.msra.mxu0 0.0
    %1132 = vmatprep.mubr.f32.mxu0 0.0
    %1133 = vmatmul.mubr.f32.gmra.mrb[0].mxu0 %v1062
    %v1134 = vpop.f32.mrb[0].mxu0
    %v1135 = vadd.f32 %v1058, %v1134
    %v1136 = vpop.f32.mrb[0].mxu0
    %1137 = vdwg.mxu0
    %v1139 = vrot.slane %v1135, 6
    %v1141 = vsel %vm1064, %v1050, %v1139
    %v1143 = vrot.slane %v1141, 1
    %vm1145 = vcmask 1040384
    %v1146 = vsel %vm1145, %v1141, %v1143
    %v1147 = vrot.slane %v1141, 2
    %v1149 = vsel %vm1145, %v1143, %v1147
    %v1150 = vld [vmem:[%s10] sm:$0xff]
    %v1151 = vld [vmem:[%s10 + $0x8] sm:$0xff]
    %v1152 = vld [vmem:[%s10 + $0x10] sm:$0xff]
    %v1153 = vld [vmem:[%s10 + $0x18] sm:$0xff]
    %v1154 = vld [vmem:[%s10 + $0x20] sm:$0xff]
    %v1155 = vld [vmem:[%s10 + $0x28] sm:$0xff]
    %v1156 = vld [vmem:[%s10 + $0x30] sm:$0xff]
    %v1157 = vld [vmem:[%s10 + $0x38] sm:$0xff]
    %v1158 = vld [vmem:[%s10 + $0x40] sm:$0xff]
    %v1159 = vld [vmem:[%s10 + $0x48] sm:$0xff]
    %v1160 = vld [vmem:[%s10 + $0x50] sm:$0xff]
    %v1161 = vld [vmem:[%s10 + $0x58] sm:$0xff]
    %v1162 = vld [vmem:[%s10 + $0x60] sm:$0xff]
    %v1163 = vld [vmem:[%s10 + $0x68] sm:$0xff]
    %v1164 = vld [vmem:[%s10 + $0x70] sm:$0xff]
    %v1165 = vld [vmem:[%s10 + $0x78] sm:$0xff]
    %v1166 = vld [vmem:[%s11] sm:$0xff]
    %v1167 = vld [vmem:[%s11 + $0x8] sm:$0xff]
    %v1168 = vld [vmem:[%s11 + $0x10] sm:$0xff]
    %v1169 = vld [vmem:[%s11 + $0x18] sm:$0xff]
    %v1170 = vld [vmem:[%s11 + $0x20] sm:$0xff]
    %v1171 = vld [vmem:[%s11 + $0x28] sm:$0xff]
    %v1172 = vld [vmem:[%s11 + $0x30] sm:$0xff]
    %v1173 = vld [vmem:[%s11 + $0x38] sm:$0xff]
    %v1174 = vld [vmem:[%s11 + $0x40] sm:$0xff]
    %v1175 = vld [vmem:[%s11 + $0x48] sm:$0xff]
    %v1176 = vld [vmem:[%s11 + $0x50] sm:$0xff]
    %v1177 = vld [vmem:[%s11 + $0x58] sm:$0xff]
    %v1178 = vld [vmem:[%s11 + $0x60] sm:$0xff]
    %v1179 = vld [vmem:[%s11 + $0x68] sm:$0xff]
    %v1180 = vld [vmem:[%s11 + $0x70] sm:$0xff]
    %v1181 = vld [vmem:[%s11 + $0x78] sm:$0xff]
    %1182 = vmatprep.subr.mxu0 0.0
    %1183 = vmatpush1.msra.mxu0 %v1166
    %1184 = vmatprep.subr.mxu0 0.0
    %1185 = vmatpush1.msra.mxu0 %v1167
    %1186 = vmatprep.subr.mxu0 0.0
    %1187 = vmatpush1.msra.mxu0 %v1168
    %1188 = vmatprep.subr.mxu0 0.0
    %1189 = vmatpush1.msra.mxu0 %v1169
    %1190 = vmatprep.subr.mxu0 0.0
    %1191 = vmatpush1.msra.mxu0 %v1170
    %1192 = vmatprep.subr.mxu0 0.0
    %1193 = vmatpush1.msra.mxu0 %v1171
    %1194 = vmatprep.subr.mxu0 0.0
    %1195 = vmatpush1.msra.mxu0 %v1172
    %1196 = vmatprep.subr.mxu0 0.0
    %1197 = vmatpush1.msra.mxu0 %v1173
    %1198 = vmatprep.subr.mxu0 0.0
    %1199 = vmatpush1.msra.mxu0 %v1174
    %1200 = vmatprep.subr.mxu0 0.0
    %1201 = vmatpush1.msra.mxu0 %v1175
    %1202 = vmatprep.subr.mxu0 0.0
    %1203 = vmatpush1.msra.mxu0 %v1176
    %1204 = vmatprep.subr.mxu0 0.0
    %1205 = vmatpush1.msra.mxu0 %v1177
    %1206 = vmatprep.subr.mxu0 0.0
    %1207 = vmatpush1.msra.mxu0 %v1178
    %1208 = vmatprep.subr.mxu0 0.0
    %1209 = vmatpush1.msra.mxu0 %v1179
    %1210 = vmatprep.subr.mxu0 0.0
    %1211 = vmatpush1.msra.mxu0 %v1180
    %1212 = vmatprep.subr.mxu0 0.0
    %1213 = vmatpush1.msra.mxu0 %v1181
    %1214 = vmatprep.subr.mxu0 0.0
    %1215 = vmatpush1.msra.mxu0 0.0
    %1216 = vmatprep.subr.mxu0 0.0
    %1217 = vmatpush1.msra.mxu0 0.0
    %1218 = vmatprep.subr.mxu0 0.0
    %1219 = vmatpush1.msra.mxu0 0.0
    %1220 = vmatprep.subr.mxu0 0.0
    %1221 = vmatpush1.msra.mxu0 0.0
    %1222 = vmatprep.subr.mxu0 0.0
    %1223 = vmatpush1.msra.mxu0 0.0
    %1224 = vmatprep.subr.mxu0 0.0
    %1225 = vmatpush1.msra.mxu0 0.0
    %1226 = vmatprep.subr.mxu0 0.0
    %1227 = vmatpush1.msra.mxu0 0.0
    %1228 = vmatprep.subr.mxu0 0.0
    %1229 = vmatpush1.msra.mxu0 0.0
    %1230 = vmatprep.subr.mxu0 0.0
    %1231 = vmatpush1.msra.mxu0 0.0
    %1232 = vmatprep.subr.mxu0 0.0
    %1233 = vmatpush1.msra.mxu0 0.0
    %1234 = vmatprep.subr.mxu0 0.0
    %1235 = vmatpush1.msra.mxu0 0.0
    %1236 = vmatprep.subr.mxu0 0.0
    %1237 = vmatpush1.msra.mxu0 0.0
    %1238 = vmatprep.subr.mxu0 0.0
    %1239 = vmatpush1.msra.mxu0 0.0
    %1240 = vmatprep.subr.mxu0 0.0
    %1241 = vmatpush1.msra.mxu0 0.0
    %1242 = vmatprep.subr.mxu0 0.0
    %1243 = vmatpush1.msra.mxu0 0.0
    %1244 = vmatprep.subr.mxu0 0.0
    %1245 = vmatpush1.msra.mxu0 0.0
    %1246 = vmatprep.mubr.f32.mxu0 0.0
    %1247 = vmatmul.mubr.f32.gmra.mrb[0].mxu0 %v1149
    %v1248 = vpop.f32.mrb[0].mxu0
    %v1249 = vadd.f32 0.0, %v1248
    %v1250 = vpop.f32.mrb[0].mxu0
    %1251 = vdwg.mxu0
    %1252 = vmatprep.subr.mxu0 0.0
    %1253 = vmatpush1.msra.mxu0 %v1150
    %1254 = vmatprep.subr.mxu0 0.0
    %1255 = vmatpush1.msra.mxu0 %v1151
    %1256 = vmatprep.subr.mxu0 0.0
    %1257 = vmatpush1.msra.mxu0 %v1152
    %1258 = vmatprep.subr.mxu0 0.0
    %1259 = vmatpush1.msra.mxu0 %v1153
    %1260 = vmatprep.subr.mxu0 0.0
    %1261 = vmatpush1.msra.mxu0 %v1154
    %1262 = vmatprep.subr.mxu0 0.0
    %1263 = vmatpush1.msra.mxu0 %v1155
    %1264 = vmatprep.subr.mxu0 0.0
    %1265 = vmatpush1.msra.mxu0 %v1156
    %1266 = vmatprep.subr.mxu0 0.0
    %1267 = vmatpush1.msra.mxu0 %v1157
    %1268 = vmatprep.subr.mxu0 0.0
    %1269 = vmatpush1.msra.mxu0 %v1158
    %1270 = vmatprep.subr.mxu0 0.0
    %1271 = vmatpush1.msra.mxu0 %v1159
    %1272 = vmatprep.subr.mxu0 0.0
    %1273 = vmatpush1.msra.mxu0 %v1160
    %1274 = vmatprep.subr.mxu0 0.0
    %1275 = vmatpush1.msra.mxu0 %v1161
    %1276 = vmatprep.subr.mxu0 0.0
    %1277 = vmatpush1.msra.mxu0 %v1162
    %1278 = vmatprep.subr.mxu0 0.0
    %1279 = vmatpush1.msra.mxu0 %v1163
    %1280 = vmatprep.subr.mxu0 0.0
    %1281 = vmatpush1.msra.mxu0 %v1164
    %1282 = vmatprep.subr.mxu0 0.0
    %1283 = vmatpush1.msra.mxu0 %v1165
    %1284 = vmatprep.subr.mxu0 0.0
    %1285 = vmatpush1.msra.mxu0 0.0
    %1286 = vmatprep.subr.mxu0 0.0
    %1287 = vmatpush1.msra.mxu0 0.0
    %1288 = vmatprep.subr.mxu0 0.0
    %1289 = vmatpush1.msra.mxu0 0.0
    %1290 = vmatprep.subr.mxu0 0.0
    %1291 = vmatpush1.msra.mxu0 0.0
    %1292 = vmatprep.subr.mxu0 0.0
    %1293 = vmatpush1.msra.mxu0 0.0
    %1294 = vmatprep.subr.mxu0 0.0
    %1295 = vmatpush1.msra.mxu0 0.0
    %1296 = vmatprep.subr.mxu0 0.0
    %1297 = vmatpush1.msra.mxu0 0.0
    %1298 = vmatprep.subr.mxu0 0.0
    %1299 = vmatpush1.msra.mxu0 0.0
    %1300 = vmatprep.subr.mxu0 0.0
    %1301 = vmatpush1.msra.mxu0 0.0
    %1302 = vmatprep.subr.mxu0 0.0
    %1303 = vmatpush1.msra.mxu0 0.0
    %1304 = vmatprep.subr.mxu0 0.0
    %1305 = vmatpush1.msra.mxu0 0.0
    %1306 = vmatprep.subr.mxu0 0.0
    %1307 = vmatpush1.msra.mxu0 0.0
    %1308 = vmatprep.subr.mxu0 0.0
    %1309 = vmatpush1.msra.mxu0 0.0
    %1310 = vmatprep.subr.mxu0 0.0
    %1311 = vmatpush1.msra.mxu0 0.0
    %1312 = vmatprep.subr.mxu0 0.0
    %1313 = vmatpush1.msra.mxu0 0.0
    %1314 = vmatprep.subr.mxu0 0.0
    %1315 = vmatpush1.msra.mxu0 0.0
    %1316 = vmatprep.mubr.f32.mxu0 0.0
    %1317 = vmatmul.mubr.f32.gmra.mrb[0].mxu0 %v1146
    %v1318 = vpop.f32.mrb[0].mxu0
    %v1319 = vadd.f32 %v1249, %v1318
    %v1320 = vpop.f32.mrb[0].mxu0
    %1321 = vdwg.mxu0
    %v1322 = vld [vmem:[%s12] sm:$0x1]
    %v1324 = vlaneseq
    %v1325 = vshrl.u32 %v1324, 7
    %v1326 = vsub.s32 0, %v1325
    %v1327 = vrot.slane %v1322, %v1326
    %v1329 = vadd.f32 %v1319, %v1327
    %vm1330 = vcmask 123904
    %1331 = vst.msk [vmem:[#allocation7] sm:$0x3] %vm1330, %v1329
    // Predicated region
    $region62: #{net_forward.1} parent=1 // pred_check
      _
    $region63: #{net_forward.1} parent=1 // pred_check_branch
      %1333 = sbr.rel (0) target = $region65
    $region64: #{net_forward.1} parent=1 // pred_region
      %s1335 = ssub.s32 32, 32
      %1336 = vsyncadd [#allocation4], %s1335
      %s1338 = sshll.u32 [#allocation7], 4
      %s1339 = int_to_ptr.vmem [resolvable:$true] %s1338
      %1341 = dma.vmem_to_hbm [thread:$0]  %s1339, 32, %s13, [#allocation4]
    $region65: #{net_forward.1} parent=1 // pred_fallthru
      _
    // Predicated region
    $region66: #{net_forward.1} parent=1 // pred_check
      _
    $region67: #{net_forward.1} parent=1 // pred_check_branch
      %1343 = sbr.rel (0) target = $region69
    $region68: #{net_forward.1} parent=1 // pred_region
      %1344 = dma.done [#allocation4], 32
    $region69: #{net_forward.1} parent=1 // pred_fallthru
      _
    %1345 = vsyncpa [#allocation3], 1
    %1346 = vsyncpa [#allocation6], 1
    %1347 = vsyncpa [#allocation4], 1

</llo_original>
